<compile_context>
chip_gen: v7x
topology: tpu7x:2x2x1
jax: 0.10.0
libtpu: 0.0.40
codegen_flags: <defaults>
</compile_context>

<pallas_src>
import jax
import jax.numpy as jnp
from jax import lax
from jax.experimental import pallas as pl
from jax.experimental.pallas import tpu as pltpu
import numpy as np

BN_EPS = 1e-5


# ----------------------------- fused Pallas kernel -----------------------------

def _decoder_fused_kernel(x_ref, m_ref, ubig_ref, ubias_ref,
                          m1_ref, s1_ref, o1_ref,
                          m2_ref, s2_ref, o2_ref,
                          out_ref, cat_s, y1_s):
    # x_ref  : (1, H, W*Cin)        input image, row-flat
    # m_ref  : (1, H, Fup)          merge (skip) image, pair-row flat
    # ubig   : (W*Cin, Fup)         ConvTranspose(2,2) as one matmul; ubias: (1, Fup)
    # m1     : (3, Fcat, Fup)       conv1 banded row-tap matrices (cat -> Co)
    # m2     : (3, Fup,  Fup)       conv2 banded row-tap matrices
    # s*/o*  : (1, Fup)             fused conv-bias + BatchNorm scale / offset per lane
    # out_ref: (1, H, Fup)          output, pair-row flat (lane-dense)
    # cat_s  : (H+2, Fcat) scratch  concat([up, merge]) with zero row halo (VMEM padding)
    # y1_s   : (H+2, Fup)  scratch  conv1 activation with zero row halo
    H = x_ref.shape[1]
    Fup = out_ref.shape[2]
    Fcat = cat_s.shape[1]

    # --- ConvTranspose2d(k=2, s=2): one MXU matmul per image in pair-row layout ---
    up = jnp.dot(x_ref[0], ubig_ref[...],
                 preferred_element_type=jnp.float32) + ubias_ref[...]

    # --- torch.cat([up, merge], dim=1) as lane blocks of a VMEM scratch;
    #     the 1-row zero halo for the 3x3 'same' conv is written here too ---
    zc = jnp.zeros((1, Fcat), cat_s.dtype)
    cat_s[0:1, :] = zc
    cat_s[H + 1:H + 2, :] = zc
    cat_s[1:H + 1, 0:Fup] = up.astype(cat_s.dtype)
    cat_s[1:H + 1, Fup:Fcat] = m_ref[0]

    # --- conv1 (3x3, pad 1) as 3 row-tap matmuls + fused BN(eval) + ReLU ---
    acc1 = jnp.zeros((H, Fup), jnp.float32)
    for t in range(3):
        acc1 = acc1 + jnp.dot(cat_s[t:t + H, :], m1_ref[t],
                              preferred_element_type=jnp.float32)
    y1 = jnp.maximum(acc1 * s1_ref[...] + o1_ref[...], 0.0)
    # TODO(synk): Dropout(p=0.3) / training-mode BatchNorm not implemented (eval semantics).

    zy = jnp.zeros((1, Fup), y1_s.dtype)
    y1_s[0:1, :] = zy
    y1_s[H + 1:H + 2, :] = zy
    y1_s[1:H + 1, :] = y1.astype(y1_s.dtype)

    # --- conv2 (3x3, pad 1) + BN(eval) + ReLU ---
    acc2 = jnp.zeros((H, Fup), jnp.float32)
    for t in range(3):
        acc2 = acc2 + jnp.dot(y1_s[t:t + H, :], m2_ref[t],
                              preferred_element_type=jnp.float32)
    y2 = jnp.maximum(acc2 * s2_ref[...] + o2_ref[...], 0.0)
    out_ref[0] = y2.astype(out_ref.dtype)


# ----------------------------- one-time parameter packing -----------------------------

def _pair_conv_matrices(w_hwio, width):
    """Banded matrices for a 3x3 stride-1 pad-1 conv in pair-row flat layout.

    Returns M of shape (3, 2*width*Cin, 2*width*Cout) such that
        out_pair[i] = sum_t in_pair_padded[i + t] @ M[t]
    where a pair-row packs two image rows flattened as (sub_row, column, channel)
    and in_pair_padded has one zero pair-row prepended/appended.
    Width-direction zero padding is encoded by simply omitting out-of-range taps.
    """
    KH, KW, Cin, Cout = w_hwio.shape
    # S[t, sub_in, sub_out, dy]: which conv row-tap couples these sub-rows at pair-tap t
    S = np.zeros((3, 2, 2, KH), np.float32)
    for t in range(3):
        for si in range(2):
            for so in range(2):
                dy = 2 * (t - 1) + si - so + 1
                if 0 <= dy < KH:
                    S[t, si, so, dy] = 1.0
    # T[col_in, col_out, dx]: width banding (implicit zero padding at the edges)
    T = np.zeros((width, width, KW), np.float32)
    for q in range(width):
        for dx in range(KW):
            r = q + dx - 1
            if 0 <= r < width:
                T[r, q, dx] = 1.0
    M = jnp.einsum('tabd,rqx,dxio->taribqo',
                   jnp.asarray(S), jnp.asarray(T), w_hwio)
    return M.reshape(3, 2 * width * Cin, 2 * width * Cout)


def prepare_decoder_params(params, W):
    """Hoisted (one-time) repacking of PyTorch-layout weights + BN folding."""
    Cin, Co = params['up_w'].shape[0], params['up_w'].shape[1]
    OW = 2 * W

    # ConvTranspose2d(Cin, Co, 2, 2):  up_pair[i] = x_flat[i] @ Ubig + ubias
    # up[2i+a, 2j+b, co] = sum_ci x[i,j,ci] * Wt[ci,co,a,b] + bias[co]
    P = np.zeros((W, OW, 2), np.float32)
    for j in range(W):
        for b in range(2):
            P[j, 2 * j + b, b] = 1.0
    ubig = jnp.einsum('jkb,ioab->jiako', jnp.asarray(P), params['up_w'])
    ubig = ubig.reshape(W * Cin, 2 * OW * Co)
    ubias = jnp.tile(params['up_b'], 2 * OW)[None, :]

    def fold_bn(bias, gamma, beta, mean, var):
        s = gamma / jnp.sqrt(var + BN_EPS)
        return s, beta + (bias - mean) * s

    lane = lambda v: jnp.tile(v, 2 * OW)[None, :]

    # conv1 input is concat([up, merge]) -> split the banded matrix into the two
    # channel halves so the kernel never has to interleave channels.
    w1 = jnp.transpose(params['c1_w'], (2, 3, 1, 0))           # -> HWIO, Cin = 2*Co
    m1 = jnp.concatenate([_pair_conv_matrices(w1[:, :, :Co, :], OW),
                          _pair_conv_matrices(w1[:, :, Co:, :], OW)], axis=1)
    s1, o1 = fold_bn(params['c1_b'], params['bn1_gamma'], params['bn1_beta'],
                     params['bn1_mean'], params['bn1_var'])

    w2 = jnp.transpose(params['c2_w'], (2, 3, 1, 0))
    m2 = _pair_conv_matrices(w2, OW)
    s2, o2 = fold_bn(params['c2_b'], params['bn2_gamma'], params['bn2_beta'],
                     params['bn2_mean'], params['bn2_var'])

    return {'ubig': ubig, 'ubias': ubias,
            'm1': m1, 's1': lane(s1), 'o1': lane(o1),
            'm2': m2, 's2': lane(s2), 'o2': lane(o2)}


# ----------------------------- forward wrapper -----------------------------

def decoder_block_forward(prep, x_nchw, merge_nchw, *, compute_dtype=jnp.float32):
    """Fused decoder block. Accepts / returns NCHW to match PyTorch.

    compute_dtype=jnp.bfloat16 can be used on v6e/v7x for MXU peak (accumulation
    stays f32); the test below runs f32 for bit-tight comparison to the reference.
    """
    N, Cin, H, W = x_nchw.shape
    Co = merge_nchw.shape[1]
    OW = 2 * W
    Fup = 2 * OW * Co            # lanes of one pair-row of a Co-channel image (=128 here)
    Fcat = 2 * Fup               # up ++ merge

    x = jnp.transpose(x_nchw, (0, 2, 3, 1)).reshape(N, H, W * Cin).astype(compute_dtype)
    m = jnp.transpose(merge_nchw, (0, 2, 3, 1)).reshape(N, H, Fup).astype(compute_dtype)

    out = pl.pallas_call(
        _decoder_fused_kernel,
        out_shape=jax.ShapeDtypeStruct((N, H, Fup), jnp.float32),
        grid=(N,),
        in_specs=[
            pl.BlockSpec((1, H, W * Cin), lambda n: (n, 0, 0)),
            pl.BlockSpec((1, H, Fup), lambda n: (n, 0, 0)),
            pl.BlockSpec((W * Cin, Fup), lambda n: (0, 0)),
            pl.BlockSpec((1, Fup), lambda n: (0, 0)),
            pl.BlockSpec((3, Fcat, Fup), lambda n: (0, 0, 0)),
            pl.BlockSpec((1, Fup), lambda n: (0, 0)),
            pl.BlockSpec((1, Fup), lambda n: (0, 0)),
            pl.BlockSpec((3, Fup, Fup), lambda n: (0, 0, 0)),
            pl.BlockSpec((1, Fup), lambda n: (0, 0)),
            pl.BlockSpec((1, Fup), lambda n: (0, 0)),
        ],
        out_specs=pl.BlockSpec((1, H, Fup), lambda n: (n, 0, 0)),
        scratch_shapes=[
            pltpu.VMEM((H + 2, Fcat), compute_dtype),
            pltpu.VMEM((H + 2, Fup), compute_dtype),
        ],
        compiler_params=pltpu.CompilerParams(
            dimension_semantics=("parallel",)),   # batch shards across TCs (v7x megacore)
    )(x, m,
      prep['ubig'].astype(compute_dtype), prep['ubias'],
      prep['m1'].astype(compute_dtype), prep['s1'], prep['o1'],
      prep['m2'].astype(compute_dtype), prep['s2'], prep['o2'])

    # pair-row flat -> NHWC -> NCHW (only boundary layout plumbing, as in the spec API)
    y = out.reshape(N, H, 2, OW, Co).reshape(N, 2 * H, OW, Co)
    return jnp.transpose(y, (0, 3, 1, 2))


# ----------------------------- parameters -----------------------------

def init_params(key, in_channels, out_channels):
    ks = jax.random.split(key, 16)
    p = {}
    p['up_w'] = 0.1 * jax.random.normal(ks[0], (in_channels, out_channels, 2, 2), jnp.float32)
    p['up_b'] = 0.1 * jax.random.normal(ks[1], (out_channels,), jnp.float32)
    c1_in = out_channels * 2
    p['c1_w'] = 0.1 * jax.random.normal(ks[2], (out_channels, c1_in, 3, 3), jnp.float32)
    p['c1_b'] = 0.1 * jax.random.normal(ks[3], (out_channels,), jnp.float32)
    p['c2_w'] = 0.1 * jax.random.normal(ks[4], (out_channels, out_channels, 3, 3), jnp.float32)
    p['c2_b'] = 0.1 * jax.random.normal(ks[5], (out_channels,), jnp.float32)
    for i, base in [(1, 6), (2, 10)]:
        p[f'bn{i}_gamma'] = 0.5 + jax.random.uniform(ks[base + 0], (out_channels,), jnp.float32)
        p[f'bn{i}_beta'] = 0.1 * jax.random.normal(ks[base + 1], (out_channels,), jnp.float32)
        p[f'bn{i}_mean'] = 0.1 * jax.random.normal(ks[base + 2], (out_channels,), jnp.float32)
        p[f'bn{i}_var'] = 0.5 + jax.random.uniform(ks[base + 3], (out_channels,), jnp.float32)
    return p


# ----------------------------- pure-JAX reference -----------------------------

def decoder_block_reference(params, x_nchw, merge_nchw):
    x = jnp.transpose(x_nchw, (0, 2, 3, 1))
    m = jnp.transpose(merge_nchw, (0, 2, 3, 1))
    N, H, W, _ = x.shape
    Co = params['up_w'].shape[1]
    t = jnp.einsum('nijc,cdab->niajbd', x, params['up_w'])
    up = t.reshape(N, 2 * H, 2 * W, Co) + params['up_b']
    cat = jnp.concatenate([up, m], axis=-1)

    def block(h, w_pt, b, g, beta, mean, var):
        w = jnp.transpose(w_pt, (2, 3, 1, 0))
        z = lax.conv_general_dilated(h, w, (1, 1), 'SAME',
                                     dimension_numbers=('NHWC', 'HWIO', 'NHWC')) + b
        z = (z - mean) / jnp.sqrt(var + BN_EPS) * g + beta
        return jnp.maximum(z, 0.0)

    h = block(cat, params['c1_w'], params['c1_b'], params['bn1_gamma'],
              params['bn1_beta'], params['bn1_mean'], params['bn1_var'])
    h = block(h, params['c2_w'], params['c2_b'], params['bn2_gamma'],
              params['bn2_beta'], params['bn2_mean'], params['bn2_var'])
    return jnp.transpose(h, (0, 3, 1, 2))


# ----------------------------- main -----------------------------

if __name__ == "__main__":
    key = jax.random.PRNGKey(0)
    in_channels, out_channels = 8, 4
    N, H, W = 2, 8, 8
    kx, km, kp = jax.random.split(key, 3)

    x = jax.random.normal(kx, (N, in_channels, H, W), jnp.float32)            # NCHW
    merge = jax.random.normal(km, (N, out_channels, 2 * H, 2 * W), jnp.float32)
    params = init_params(kp, in_channels, out_channels)

    prep = prepare_decoder_params(params, W)                                   # one-time packing
    out = jax.block_until_ready(decoder_block_forward(prep, x, merge))
    ref = jax.block_until_ready(decoder_block_reference(params, x, merge))

    assert out.shape == (N, out_channels, 2 * H, 2 * W), out.shape
    np.testing.assert_allclose(np.asarray(out), np.asarray(ref), rtol=1e-4, atol=1e-4)
    print("KERNEL_OK")
</pallas_src>

<mosaic_0001>
module attributes {stable_mosaic.version = 11 : i64} {
  func.func @_decoder_fused_kernel(%arg0: i32, %arg1: memref<1x8x64xf32, #tpu.memory_space<vmem>>, %arg2: memref<1x8x128xf32, #tpu.memory_space<vmem>>, %arg3: memref<64x128xf32, #tpu.memory_space<vmem>>, %arg4: memref<1x128xf32, #tpu.memory_space<vmem>>, %arg5: memref<3x256x128xf32, #tpu.memory_space<vmem>>, %arg6: memref<1x128xf32, #tpu.memory_space<vmem>>, %arg7: memref<1x128xf32, #tpu.memory_space<vmem>>, %arg8: memref<3x128x128xf32, #tpu.memory_space<vmem>>, %arg9: memref<1x128xf32, #tpu.memory_space<vmem>>, %arg10: memref<1x128xf32, #tpu.memory_space<vmem>>, %arg11: memref<1x8x128xf32, #tpu.memory_space<vmem>>, %arg12: memref<10x256xf32, #tpu.memory_space<vmem>>, %arg13: memref<10x128xf32, #tpu.memory_space<vmem>>) attributes {dimension_semantics = [#tpu.dimension_semantics<parallel>], iteration_bounds = array<i64: 2>, scalar_prefetch = 0 : i64, scratch_operands = 2 : i64, tpu.core_type = #tpu.core_type<tc>, window_params = [{transform_indices = @transform_0, window_bounds = array<i64: 1, 8, 64>}, {transform_indices = @transform_1, window_bounds = array<i64: 1, 8, 128>}, {pipeline_mode = #tpu.pipeline_mode<synchronous>, transform_indices = @transform_2, window_bounds = array<i64: 64, 128>}, {pipeline_mode = #tpu.pipeline_mode<synchronous>, transform_indices = @transform_3, window_bounds = array<i64: 1, 128>}, {pipeline_mode = #tpu.pipeline_mode<synchronous>, transform_indices = @transform_4, window_bounds = array<i64: 3, 256, 128>}, {pipeline_mode = #tpu.pipeline_mode<synchronous>, transform_indices = @transform_5, window_bounds = array<i64: 1, 128>}, {pipeline_mode = #tpu.pipeline_mode<synchronous>, transform_indices = @transform_6, window_bounds = array<i64: 1, 128>}, {pipeline_mode = #tpu.pipeline_mode<synchronous>, transform_indices = @transform_7, window_bounds = array<i64: 3, 128, 128>}, {pipeline_mode = #tpu.pipeline_mode<synchronous>, transform_indices = @transform_8, window_bounds = array<i64: 1, 128>}, {pipeline_mode = #tpu.pipeline_mode<synchronous>, transform_indices = @transform_9, window_bounds = array<i64: 1, 128>}, {transform_indices = @transform_10, window_bounds = array<i64: 1, 8, 128>}]} {
    %c0 = arith.constant 0 : index
    %c0_0 = arith.constant 0 : index
    %c0_1 = arith.constant 0 : index
    %0 = vector.load %arg1[%c0, %c0_0, %c0_1] : memref<1x8x64xf32, #tpu.memory_space<vmem>>, vector<1x8x64xf32>
    %1 = vector.shape_cast %0 : vector<1x8x64xf32> to vector<8x64xf32>
    %c0_2 = arith.constant 0 : index
    %c0_3 = arith.constant 0 : index
    %2 = vector.load %arg3[%c0_2, %c0_3] : memref<64x128xf32, #tpu.memory_space<vmem>>, vector<64x128xf32>
    %cst = arith.constant dense<0.000000e+00> : vector<8x128xf32>
    %3 = tpu.matmul %1, %2, %cst {dimension_numbers = #tpu.dot_dimension_numbers<[1], [0], [0], [1], [0, 0, 1, 1], [], []>} : vector<8x64xf32>, vector<64x128xf32>, vector<8x128xf32> -> vector<8x128xf32>
    %c0_4 = arith.constant 0 : index
    %c0_5 = arith.constant 0 : index
    %4 = vector.load %arg4[%c0_4, %c0_5] : memref<1x128xf32, #tpu.memory_space<vmem>>, vector<1x128xf32>
    %5 = vector.broadcast %4 : vector<1x128xf32> to vector<8x128xf32>
    %6 = arith.addf %3, %5 : vector<8x128xf32>
    %cst_6 = arith.constant 0.000000e+00 : f32
    %7 = vector.broadcast %cst_6 : f32 to vector<1x256xf32>
    %c0_7 = arith.constant 0 : index
    %c0_8 = arith.constant 0 : index
    %8 = vector.load %arg12[%c0_7, %c0_8] : memref<10x256xf32, #tpu.memory_space<vmem>>, vector<1x256xf32>
    tpu.vector_store %arg12[%c0_7, %c0_8], %7 {strides = array<i32>} : memref<10x256xf32, #tpu.memory_space<vmem>>, vector<1x256xf32>,
    %c9 = arith.constant 9 : index
    %c0_9 = arith.constant 0 : index
    %9 = vector.load %arg12[%c9, %c0_9] : memref<10x256xf32, #tpu.memory_space<vmem>>, vector<1x256xf32>
    tpu.vector_store %arg12[%c9, %c0_9], %7 {strides = array<i32>} : memref<10x256xf32, #tpu.memory_space<vmem>>, vector<1x256xf32>,
    %c1 = arith.constant 1 : index
    %c0_10 = arith.constant 0 : index
    %10 = vector.load %arg12[%c1, %c0_10] : memref<10x256xf32, #tpu.memory_space<vmem>>, vector<8x128xf32>
    tpu.vector_store %arg12[%c1, %c0_10], %6 {strides = array<i32>} : memref<10x256xf32, #tpu.memory_space<vmem>>, vector<8x128xf32>,
    %c0_11 = arith.constant 0 : index
    %c0_12 = arith.constant 0 : index
    %c0_13 = arith.constant 0 : index
    %11 = vector.load %arg2[%c0_11, %c0_12, %c0_13] : memref<1x8x128xf32, #tpu.memory_space<vmem>>, vector<1x8x128xf32>
    %12 = vector.shape_cast %11 : vector<1x8x128xf32> to vector<8x128xf32>
    %c1_14 = arith.constant 1 : index
    %c128 = arith.constant 128 : index
    %13 = vector.load %arg12[%c1_14, %c128] : memref<10x256xf32, #tpu.memory_space<vmem>>, vector<8x128xf32>
    tpu.vector_store %arg12[%c1_14, %c128], %12 {strides = array<i32>} : memref<10x256xf32, #tpu.memory_space<vmem>>, vector<8x128xf32>,
    %cst_15 = arith.constant 0.000000e+00 : f32
    %14 = vector.broadcast %cst_15 : f32 to vector<8x128xf32>
    %c0_16 = arith.constant 0 : index
    %c0_17 = arith.constant 0 : index
    %15 = vector.load %arg12[%c0_16, %c0_17] : memref<10x256xf32, #tpu.memory_space<vmem>>, vector<8x256xf32>
    %c0_18 = arith.constant 0 : index
    %c0_19 = arith.constant 0 : index
    %c0_20 = arith.constant 0 : index
    %16 = vector.load %arg5[%c0_18, %c0_19, %c0_20] : memref<3x256x128xf32, #tpu.memory_space<vmem>>, vector<1x256x128xf32>
    %17 = vector.shape_cast %16 : vector<1x256x128xf32> to vector<256x128xf32>
    %cst_21 = arith.constant dense<0.000000e+00> : vector<8x128xf32>
    %18 = tpu.matmul %15, %17, %cst_21 {dimension_numbers = #tpu.dot_dimension_numbers<[1], [0], [0], [1], [0, 0, 1, 1], [], []>} : vector<8x256xf32>, vector<256x128xf32>, vector<8x128xf32> -> vector<8x128xf32>
    %19 = arith.addf %14, %18 : vector<8x128xf32>
    %c1_22 = arith.constant 1 : index
    %c0_23 = arith.constant 0 : index
    %20 = vector.load %arg12[%c1_22, %c0_23] : memref<10x256xf32, #tpu.memory_space<vmem>>, vector<8x256xf32>
    %c1_24 = arith.constant 1 : index
    %c0_25 = arith.constant 0 : index
    %c0_26 = arith.constant 0 : index
    %21 = vector.load %arg5[%c1_24, %c0_25, %c0_26] : memref<3x256x128xf32, #tpu.memory_space<vmem>>, vector<1x256x128xf32>
    %22 = vector.shape_cast %21 : vector<1x256x128xf32> to vector<256x128xf32>
    %cst_27 = arith.constant dense<0.000000e+00> : vector<8x128xf32>
    %23 = tpu.matmul %20, %22, %cst_27 {dimension_numbers = #tpu.dot_dimension_numbers<[1], [0], [0], [1], [0, 0, 1, 1], [], []>} : vector<8x256xf32>, vector<256x128xf32>, vector<8x128xf32> -> vector<8x128xf32>
    %24 = arith.addf %19, %23 : vector<8x128xf32>
    %c2 = arith.constant 2 : index
    %c0_28 = arith.constant 0 : index
    %25 = vector.load %arg12[%c2, %c0_28] : memref<10x256xf32, #tpu.memory_space<vmem>>, vector<8x256xf32>
    %c2_29 = arith.constant 2 : index
    %c0_30 = arith.constant 0 : index
    %c0_31 = arith.constant 0 : index
    %26 = vector.load %arg5[%c2_29, %c0_30, %c0_31] : memref<3x256x128xf32, #tpu.memory_space<vmem>>, vector<1x256x128xf32>
    %27 = vector.shape_cast %26 : vector<1x256x128xf32> to vector<256x128xf32>
    %cst_32 = arith.constant dense<0.000000e+00> : vector<8x128xf32>
    %28 = tpu.matmul %25, %27, %cst_32 {dimension_numbers = #tpu.dot_dimension_numbers<[1], [0], [0], [1], [0, 0, 1, 1], [], []>} : vector<8x256xf32>, vector<256x128xf32>, vector<8x128xf32> -> vector<8x128xf32>
    %29 = arith.addf %24, %28 : vector<8x128xf32>
    %c0_33 = arith.constant 0 : index
    %c0_34 = arith.constant 0 : index
    %30 = vector.load %arg6[%c0_33, %c0_34] : memref<1x128xf32, #tpu.memory_space<vmem>>, vector<1x128xf32>
    %31 = vector.broadcast %30 : vector<1x128xf32> to vector<8x128xf32>
    %32 = arith.mulf %29, %31 : vector<8x128xf32>
    %c0_35 = arith.constant 0 : index
    %c0_36 = arith.constant 0 : index
    %33 = vector.load %arg7[%c0_35, %c0_36] : memref<1x128xf32, #tpu.memory_space<vmem>>, vector<1x128xf32>
    %34 = vector.broadcast %33 : vector<1x128xf32> to vector<8x128xf32>
    %35 = arith.addf %32, %34 : vector<8x128xf32>
    %cst_37 = arith.constant 0.000000e+00 : f32
    %36 = vector.broadcast %cst_37 : f32 to vector<8x128xf32>
    %37 = arith.maximumf %35, %36 : vector<8x128xf32>
    %cst_38 = arith.constant 0.000000e+00 : f32
    %38 = vector.broadcast %cst_38 : f32 to vector<1x128xf32>
    %c0_39 = arith.constant 0 : index
    %c0_40 = arith.constant 0 : index
    %39 = vector.load %arg13[%c0_39, %c0_40] : memref<10x128xf32, #tpu.memory_space<vmem>>, vector<1x128xf32>
    tpu.vector_store %arg13[%c0_39, %c0_40], %38 {strides = array<i32>} : memref<10x128xf32, #tpu.memory_space<vmem>>, vector<1x128xf32>,
    %c9_41 = arith.constant 9 : index
    %c0_42 = arith.constant 0 : index
    %40 = vector.load %arg13[%c9_41, %c0_42] : memref<10x128xf32, #tpu.memory_space<vmem>>, vector<1x128xf32>
    tpu.vector_store %arg13[%c9_41, %c0_42], %38 {strides = array<i32>} : memref<10x128xf32, #tpu.memory_space<vmem>>, vector<1x128xf32>,
    %c1_43 = arith.constant 1 : index
    %c0_44 = arith.constant 0 : index
    %41 = vector.load %arg13[%c1_43, %c0_44] : memref<10x128xf32, #tpu.memory_space<vmem>>, vector<8x128xf32>
    tpu.vector_store %arg13[%c1_43, %c0_44], %37 {strides = array<i32>} : memref<10x128xf32, #tpu.memory_space<vmem>>, vector<8x128xf32>,
    %cst_45 = arith.constant 0.000000e+00 : f32
    %42 = vector.broadcast %cst_45 : f32 to vector<8x128xf32>
    %c0_46 = arith.constant 0 : index
    %c0_47 = arith.constant 0 : index
    %43 = vector.load %arg13[%c0_46, %c0_47] : memref<10x128xf32, #tpu.memory_space<vmem>>, vector<8x128xf32>
    %c0_48 = arith.constant 0 : index
    %c0_49 = arith.constant 0 : index
    %c0_50 = arith.constant 0 : index
    %44 = vector.load %arg8[%c0_48, %c0_49, %c0_50] : memref<3x128x128xf32, #tpu.memory_space<vmem>>, vector<1x128x128xf32>
    %45 = vector.shape_cast %44 : vector<1x128x128xf32> to vector<128x128xf32>
    %cst_51 = arith.constant dense<0.000000e+00> : vector<8x128xf32>
    %46 = tpu.matmul %43, %45, %cst_51 {dimension_numbers = #tpu.dot_dimension_numbers<[1], [0], [0], [1], [0, 0, 1, 1], [], []>} : vector<8x128xf32>, vector<128x128xf32>, vector<8x128xf32> -> vector<8x128xf32>
    %47 = arith.addf %42, %46 : vector<8x128xf32>
    %c1_52 = arith.constant 1 : index
    %c0_53 = arith.constant 0 : index
    %48 = vector.load %arg13[%c1_52, %c0_53] : memref<10x128xf32, #tpu.memory_space<vmem>>, vector<8x128xf32>
    %c1_54 = arith.constant 1 : index
    %c0_55 = arith.constant 0 : index
    %c0_56 = arith.constant 0 : index
    %49 = vector.load %arg8[%c1_54, %c0_55, %c0_56] : memref<3x128x128xf32, #tpu.memory_space<vmem>>, vector<1x128x128xf32>
    %50 = vector.shape_cast %49 : vector<1x128x128xf32> to vector<128x128xf32>
    %cst_57 = arith.constant dense<0.000000e+00> : vector<8x128xf32>
    %51 = tpu.matmul %48, %50, %cst_57 {dimension_numbers = #tpu.dot_dimension_numbers<[1], [0], [0], [1], [0, 0, 1, 1], [], []>} : vector<8x128xf32>, vector<128x128xf32>, vector<8x128xf32> -> vector<8x128xf32>
    %52 = arith.addf %47, %51 : vector<8x128xf32>
    %c2_58 = arith.constant 2 : index
    %c0_59 = arith.constant 0 : index
    %53 = vector.load %arg13[%c2_58, %c0_59] : memref<10x128xf32, #tpu.memory_space<vmem>>, vector<8x128xf32>
    %c2_60 = arith.constant 2 : index
    %c0_61 = arith.constant 0 : index
    %c0_62 = arith.constant 0 : index
    %54 = vector.load %arg8[%c2_60, %c0_61, %c0_62] : memref<3x128x128xf32, #tpu.memory_space<vmem>>, vector<1x128x128xf32>
    %55 = vector.shape_cast %54 : vector<1x128x128xf32> to vector<128x128xf32>
    %cst_63 = arith.constant dense<0.000000e+00> : vector<8x128xf32>
    %56 = tpu.matmul %53, %55, %cst_63 {dimension_numbers = #tpu.dot_dimension_numbers<[1], [0], [0], [1], [0, 0, 1, 1], [], []>} : vector<8x128xf32>, vector<128x128xf32>, vector<8x128xf32> -> vector<8x128xf32>
    %57 = arith.addf %52, %56 : vector<8x128xf32>
    %c0_64 = arith.constant 0 : index
    %c0_65 = arith.constant 0 : index
    %58 = vector.load %arg9[%c0_64, %c0_65] : memref<1x128xf32, #tpu.memory_space<vmem>>, vector<1x128xf32>
    %59 = vector.broadcast %58 : vector<1x128xf32> to vector<8x128xf32>
    %60 = arith.mulf %57, %59 : vector<8x128xf32>
    %c0_66 = arith.constant 0 : index
    %c0_67 = arith.constant 0 : index
    %61 = vector.load %arg10[%c0_66, %c0_67] : memref<1x128xf32, #tpu.memory_space<vmem>>, vector<1x128xf32>
    %62 = vector.broadcast %61 : vector<1x128xf32> to vector<8x128xf32>
    %63 = arith.addf %60, %62 : vector<8x128xf32>
    %cst_68 = arith.constant 0.000000e+00 : f32
    %64 = vector.broadcast %cst_68 : f32 to vector<8x128xf32>
    %65 = arith.maximumf %63, %64 : vector<8x128xf32>
    %c0_69 = arith.constant 0 : index
    %c0_70 = arith.constant 0 : index
    %c0_71 = arith.constant 0 : index
    %66 = vector.load %arg11[%c0_69, %c0_70, %c0_71] : memref<1x8x128xf32, #tpu.memory_space<vmem>>, vector<1x8x128xf32>
    %67 = vector.shape_cast %66 : vector<1x8x128xf32> to vector<8x128xf32>
    %68 = vector.shape_cast %65 : vector<8x128xf32> to vector<1x8x128xf32>
    tpu.vector_store %arg11[%c0_69, %c0_70, %c0_71], %68 {strides = array<i32>} : memref<1x8x128xf32, #tpu.memory_space<vmem>>, vector<1x8x128xf32>,
    return
  }
  func.func @transform_0(%arg0: i32) -> (i32, i32, i32) {
    %c0_i32 = arith.constant 0 : i32
    %c0_i32_0 = arith.constant 0 : i32
    %c0_i32_1 = arith.constant 0 : i32
    return %arg0, %c0_i32, %c0_i32_0 : i32, i32, i32
  }
  func.func @transform_1(%arg0: i32) -> (i32, i32, i32) {
    %c0_i32 = arith.constant 0 : i32
    %c0_i32_0 = arith.constant 0 : i32
    %c0_i32_1 = arith.constant 0 : i32
    return %arg0, %c0_i32, %c0_i32_0 : i32, i32, i32
  }
  func.func @transform_2(%arg0: i32) -> (i32, i32) {
    %c0_i32 = arith.constant 0 : i32
    %c0_i32_0 = arith.constant 0 : i32
    %c0_i32_1 = arith.constant 0 : i32
    return %c0_i32, %c0_i32_0 : i32, i32
  }
  func.func @transform_3(%arg0: i32) -> (i32, i32) {
    %c0_i32 = arith.constant 0 : i32
    %c0_i32_0 = arith.constant 0 : i32
    %c0_i32_1 = arith.constant 0 : i32
    return %c0_i32, %c0_i32_0 : i32, i32
  }
  func.func @transform_4(%arg0: i32) -> (i32, i32, i32) {
    %c0_i32 = arith.constant 0 : i32
    %c0_i32_0 = arith.constant 0 : i32
    %c0_i32_1 = arith.constant 0 : i32
    %c0_i32_2 = arith.constant 0 : i32
    return %c0_i32, %c0_i32_0, %c0_i32_1 : i32, i32, i32
  }
  func.func @transform_5(%arg0: i32) -> (i32, i32) {
    %c0_i32 = arith.constant 0 : i32
    %c0_i32_0 = arith.constant 0 : i32
    %c0_i32_1 = arith.constant 0 : i32
    return %c0_i32, %c0_i32_0 : i32, i32
  }
  func.func @transform_6(%arg0: i32) -> (i32, i32) {
    %c0_i32 = arith.constant 0 : i32
    %c0_i32_0 = arith.constant 0 : i32
    %c0_i32_1 = arith.constant 0 : i32
    return %c0_i32, %c0_i32_0 : i32, i32
  }
  func.func @transform_7(%arg0: i32) -> (i32, i32, i32) {
    %c0_i32 = arith.constant 0 : i32
    %c0_i32_0 = arith.constant 0 : i32
    %c0_i32_1 = arith.constant 0 : i32
    %c0_i32_2 = arith.constant 0 : i32
    return %c0_i32, %c0_i32_0, %c0_i32_1 : i32, i32, i32
  }
  func.func @transform_8(%arg0: i32) -> (i32, i32) {
    %c0_i32 = arith.constant 0 : i32
    %c0_i32_0 = arith.constant 0 : i32
    %c0_i32_1 = arith.constant 0 : i32
    return %c0_i32, %c0_i32_0 : i32, i32
  }
  func.func @transform_9(%arg0: i32) -> (i32, i32) {
    %c0_i32 = arith.constant 0 : i32
    %c0_i32_0 = arith.constant 0 : i32
    %c0_i32_1 = arith.constant 0 : i32
    return %c0_i32, %c0_i32_0 : i32, i32
  }
  func.func @transform_10(%arg0: i32) -> (i32, i32, i32) {
    %c0_i32 = arith.constant 0 : i32
    %c0_i32_0 = arith.constant 0 : i32
    %c0_i32_1 = arith.constant 0 : i32
    return %arg0, %c0_i32, %c0_i32_0 : i32, i32, i32
  }
}

</mosaic_0001>

<llo_original>
// kernel: tpu_custom_call.1
$region0: #{tpu_custom_call.1}
  #allocation0 [shape = 'u32[]', space=smem, size = 0x4, offset = 0x4, fixed_abs, tag = 'smem constant byte address 0x4 - core index']
  #allocation1 [shape = 'u32[144,128]{1,0:T(1,128)}', space=vmem, size = 0x12000, scoped, tag = 'internal scratch']
  #allocation2 [shape = 'f32[10,256]{1,0:T(8,128)}', space=vmem, size = 0x4000, scoped, tag = 'scratch operand']
  #allocation3 [shape = 'f32[10,128]{1,0:T(8,128)}', space=vmem, size = 0x2000, scoped, tag = 'scratch operand']
  %s0 = inlined_call_operand.hbm [shape: f32[2,8,64], index: 0, kind: input, shape index: {}]
  %s1 = inlined_call_operand.hbm [shape: f32[2,8,128], index: 1, kind: input, shape index: {}]
  %s2 = inlined_call_operand.hbm [shape: f32[64,128], index: 2, kind: input, shape index: {}]
  %s3 = inlined_call_operand.vmem [shape: f32[1,128], index: 3, kind: input, shape index: {}]
  %s4 = inlined_call_operand.hbm [shape: f32[3,256,128], index: 4, kind: input, shape index: {}]
  %s5 = inlined_call_operand.vmem [shape: f32[1,128], index: 5, kind: input, shape index: {}]
  %s6 = inlined_call_operand.vmem [shape: f32[1,128], index: 6, kind: input, shape index: {}]
  %s7 = inlined_call_operand.hbm [shape: f32[3,128,128], index: 7, kind: input, shape index: {}]
  %s8 = inlined_call_operand.vmem [shape: f32[1,128], index: 8, kind: input, shape index: {}]
  %s9 = inlined_call_operand.vmem [shape: f32[1,128], index: 9, kind: input, shape index: {}]
  %s10 = inlined_call_operand.hbm [shape: f32[2,8,128], index: 10, kind: output, shape index: {}]
  %s11 = sld [smem:[#allocation0]]
  $region93: #{tpu_custom_call.1} parent=0
    _
  %s13 = ssub.s32 1, %s11
  %s14 = scalar_select 0, %s13, %s11
  $region1: #{tpu_custom_call.1} parent=0
    #allocation4 [shape = 'u8[8192]{0}', space=vmem, size = 0x2000, scoped, tag = 'input window, operand 0']
    #allocation5 [shape = 's32[2]{0}', space=sflag, size = 0x8, scoped, tag = 'scoped memory for tpu_custom_call.1']
    #allocation6 [shape = 's32[2]{0}', space=sflag, size = 0x8, scoped, tag = 'scoped memory for tpu_custom_call.1']
    #allocation7 [shape = 'u8[8192]{0}', space=vmem, size = 0x2000, scoped, tag = 'input window, operand 1']
    #allocation8 [shape = 's32[2]{0}', space=sflag, size = 0x8, scoped, tag = 'scoped memory for tpu_custom_call.1']
    #allocation9 [shape = 'u8[32768]{0}', space=vmem, size = 0x8000, scoped, tag = 'input window, operand 2, single buffered']
    #allocation10 [shape = 'u8[393216]{0}', space=vmem, size = 0x60000, scoped, tag = 'input window, operand 4, single buffered']
    #allocation11 [shape = 's32[1]{0}', space=sflag, size = 0x4, scoped, tag = 'scoped memory for tpu_custom_call.1']
    #allocation12 [shape = 'u8[196608]{0}', space=vmem, size = 0x30000, scoped, tag = 'input window, operand 7, single buffered']
    #allocation13 [shape = 'u8[8192]{0}', space=vmem, size = 0x2000, scoped, tag = 'output window, operand 0']
    %15 = vsyncpa [#allocation5], 0
    %s16 = scalar_lea.sflag [#allocation5], 1
    %17 = vsyncpa %s16, 0
    %18 = vsyncpa [#allocation8], 0
    %s19 = scalar_lea.sflag [#allocation8], 1
    %20 = vsyncpa %s19, 0
    %21 = vsyncpa [#allocation11], 0
    %22 = vsyncpa [#allocation6], 0
    %s23 = scalar_lea.sflag [#allocation6], 1
    %24 = vsyncpa %s23, 0
    loop: start=0, step=1, limit=4
    $region2: #{tpu_custom_call.1} parent=1 // loop_pre_header
      _
    $region3: #{tpu_custom_call.1} parent=1 // loop_header
      %s26 = sphi 0, %s30
      %p27 = scmp.ge.s32.totalorder %s26, 4
      %s36 = sphi 0, %s38
      %s39 = sphi 0, %s36
      %s40 = sphi 0, %s39
      %s56 = sphi 0, %s40
      %s62 = sphi 0, %s64
      %s65 = sphi 0, %s62
      %s66 = sphi 0, %s65
      %s82 = sphi 0, %s66
      %s86 = sphi 0, %s86
      %s88 = sphi 0, %s86
      %s89 = sphi 0, %s88
      %s103 = sphi 0, %s89
      %s107 = sphi 0, %s107
      %s109 = sphi 0, %s107
      %s110 = sphi 0, %s109
      %s124 = sphi 0, %s110
      %s128 = sphi 0, %s128
      %s130 = sphi 0, %s128
      %s131 = sphi 0, %s130
      %s145 = sphi 0, %s131
      %s149 = sphi 0, %s149
      %s151 = sphi 0, %s149
      %s152 = sphi 0, %s151
      %s166 = sphi 0, %s152
      %s170 = sphi 0, %s170
      %s172 = sphi 0, %s170
      %s173 = sphi 0, %s172
      %s187 = sphi 0, %s173
      %s191 = sphi 0, %s191
      %s193 = sphi 0, %s191
      %s194 = sphi 0, %s193
      %s208 = sphi 0, %s194
      %s212 = sphi 0, %s212
      %s214 = sphi 0, %s212
      %s215 = sphi 0, %s214
      %s229 = sphi 0, %s215
      %s233 = sphi 0, %s233
      %s235 = sphi 0, %s233
      %s236 = sphi 0, %s235
      %s250 = sphi 0, %s236
      %s256 = sphi 0, %s258
      %s259 = sphi 0, %s256
      %s260 = sphi 0, %s259
      %s276 = sphi 0, %s260
    $region4: #{tpu_custom_call.1} parent=1 // loop_header_branch
      %29 = sbr.rel (%p27) target = $region8
    $region5: #{tpu_custom_call.1} parent=1 // loop_body
      %s31 = ssub.s32 %s26, 1
      %s32 = ssub.s32 %s26, 2
      %s33 = sadd.s32 %s26, 1
      %s34 = ssub.s32 %s26, %s33
      %p35 = scmp.eq.s32.totalorder %s34, 0
      %s37 = sadd.s32 %s36, 1
      %s38 = scalar_select %p35, %s36, %s37
      %p41 = pneg %p35
      %p42 = scmp.eq.s32.totalorder %s26, 1
      %p43 = por %p41, %p42
      %p44 = scmp.ne.s32.totalorder %s36, %s39
      %p45 = scmp.eq.s32.totalorder %s26, 0
      %p46 = por %p44, %p45
      %p47 = scmp.ne.s32.totalorder %s36, %s39
      %p48 = scmp.eq.s32.totalorder %s31, 1
      %p49 = por %p47, %p48
      %p50 = scmp.ne.s32.totalorder %s39, %s40
      %p51 = scmp.eq.s32.totalorder %s31, 0
      %p52 = por %p50, %p51
      %p53 = scmp.ne.s32.totalorder %s39, %s40
      %p54 = scmp.eq.s32.totalorder %s32, 1
      %p55 = por %p53, %p54
      %p57 = scmp.ne.s32.totalorder %s40, %s56
      %p58 = scmp.eq.s32.totalorder %s32, 0
      %p59 = por %p57, %p58
      %s60 = ssub.s32 %s26, %s33
      %p61 = scmp.eq.s32.totalorder %s60, 0
      %s63 = sadd.s32 %s62, 1
      %s64 = scalar_select %p61, %s62, %s63
      %p67 = pneg %p61
      %p68 = scmp.eq.s32.totalorder %s26, 1
      %p69 = por %p67, %p68
      %p70 = scmp.ne.s32.totalorder %s62, %s65
      %p71 = scmp.eq.s32.totalorder %s26, 0
      %p72 = por %p70, %p71
      %p73 = scmp.ne.s32.totalorder %s62, %s65
      %p74 = scmp.eq.s32.totalorder %s31, 1
      %p75 = por %p73, %p74
      %p76 = scmp.ne.s32.totalorder %s65, %s66
      %p77 = scmp.eq.s32.totalorder %s31, 0
      %p78 = por %p76, %p77
      %p79 = scmp.ne.s32.totalorder %s65, %s66
      %p80 = scmp.eq.s32.totalorder %s32, 1
      %p81 = por %p79, %p80
      %p83 = scmp.ne.s32.totalorder %s66, %s82
      %p84 = scmp.eq.s32.totalorder %s32, 0
      %p85 = por %p83, %p84
      %s87 = sadd.s32 %s86, 1
      %p90 = scmp.eq.s32.totalorder %s26, 1
      %p91 = scmp.ne.s32.totalorder %s86, %s88
      %p92 = scmp.eq.s32.totalorder %s26, 0
      %p93 = por %p91, %p92
      %p94 = scmp.ne.s32.totalorder %s86, %s88
      %p95 = scmp.eq.s32.totalorder %s31, 1
      %p96 = por %p94, %p95
      %p97 = scmp.ne.s32.totalorder %s88, %s89
      %p98 = scmp.eq.s32.totalorder %s31, 0
      %p99 = por %p97, %p98
      %p100 = scmp.ne.s32.totalorder %s88, %s89
      %p101 = scmp.eq.s32.totalorder %s32, 1
      %p102 = por %p100, %p101
      %p104 = scmp.ne.s32.totalorder %s89, %s103
      %p105 = scmp.eq.s32.totalorder %s32, 0
      %p106 = por %p104, %p105
      %s108 = sadd.s32 %s107, 1
      %p111 = scmp.eq.s32.totalorder %s26, 1
      %p112 = scmp.ne.s32.totalorder %s107, %s109
      %p113 = scmp.eq.s32.totalorder %s26, 0
      %p114 = por %p112, %p113
      %p115 = scmp.ne.s32.totalorder %s107, %s109
      %p116 = scmp.eq.s32.totalorder %s31, 1
      %p117 = por %p115, %p116
      %p118 = scmp.ne.s32.totalorder %s109, %s110
      %p119 = scmp.eq.s32.totalorder %s31, 0
      %p120 = por %p118, %p119
      %p121 = scmp.ne.s32.totalorder %s109, %s110
      %p122 = scmp.eq.s32.totalorder %s32, 1
      %p123 = por %p121, %p122
      %p125 = scmp.ne.s32.totalorder %s110, %s124
      %p126 = scmp.eq.s32.totalorder %s32, 0
      %p127 = por %p125, %p126
      %s129 = sadd.s32 %s128, 1
      %p132 = scmp.eq.s32.totalorder %s26, 1
      %p133 = scmp.ne.s32.totalorder %s128, %s130
      %p134 = scmp.eq.s32.totalorder %s26, 0
      %p135 = por %p133, %p134
      %p136 = scmp.ne.s32.totalorder %s128, %s130
      %p137 = scmp.eq.s32.totalorder %s31, 1
      %p138 = por %p136, %p137
      %p139 = scmp.ne.s32.totalorder %s130, %s131
      %p140 = scmp.eq.s32.totalorder %s31, 0
      %p141 = por %p139, %p140
      %p142 = scmp.ne.s32.totalorder %s130, %s131
      %p143 = scmp.eq.s32.totalorder %s32, 1
      %p144 = por %p142, %p143
      %p146 = scmp.ne.s32.totalorder %s131, %s145
      %p147 = scmp.eq.s32.totalorder %s32, 0
      %p148 = por %p146, %p147
      %s150 = sadd.s32 %s149, 1
      %p153 = scmp.eq.s32.totalorder %s26, 1
      %p154 = scmp.ne.s32.totalorder %s149, %s151
      %p155 = scmp.eq.s32.totalorder %s26, 0
      %p156 = por %p154, %p155
      %p157 = scmp.ne.s32.totalorder %s149, %s151
      %p158 = scmp.eq.s32.totalorder %s31, 1
      %p159 = por %p157, %p158
      %p160 = scmp.ne.s32.totalorder %s151, %s152
      %p161 = scmp.eq.s32.totalorder %s31, 0
      %p162 = por %p160, %p161
      %p163 = scmp.ne.s32.totalorder %s151, %s152
      %p164 = scmp.eq.s32.totalorder %s32, 1
      %p165 = por %p163, %p164
      %p167 = scmp.ne.s32.totalorder %s152, %s166
      %p168 = scmp.eq.s32.totalorder %s32, 0
      %p169 = por %p167, %p168
      %s171 = sadd.s32 %s170, 1
      %p174 = scmp.eq.s32.totalorder %s26, 1
      %p175 = scmp.ne.s32.totalorder %s170, %s172
      %p176 = scmp.eq.s32.totalorder %s26, 0
      %p177 = por %p175, %p176
      %p178 = scmp.ne.s32.totalorder %s170, %s172
      %p179 = scmp.eq.s32.totalorder %s31, 1
      %p180 = por %p178, %p179
      %p181 = scmp.ne.s32.totalorder %s172, %s173
      %p182 = scmp.eq.s32.totalorder %s31, 0
      %p183 = por %p181, %p182
      %p184 = scmp.ne.s32.totalorder %s172, %s173
      %p185 = scmp.eq.s32.totalorder %s32, 1
      %p186 = por %p184, %p185
      %p188 = scmp.ne.s32.totalorder %s173, %s187
      %p189 = scmp.eq.s32.totalorder %s32, 0
      %p190 = por %p188, %p189
      %s192 = sadd.s32 %s191, 1
      %p195 = scmp.eq.s32.totalorder %s26, 1
      %p196 = scmp.ne.s32.totalorder %s191, %s193
      %p197 = scmp.eq.s32.totalorder %s26, 0
      %p198 = por %p196, %p197
      %p199 = scmp.ne.s32.totalorder %s191, %s193
      %p200 = scmp.eq.s32.totalorder %s31, 1
      %p201 = por %p199, %p200
      %p202 = scmp.ne.s32.totalorder %s193, %s194
      %p203 = scmp.eq.s32.totalorder %s31, 0
      %p204 = por %p202, %p203
      %p205 = scmp.ne.s32.totalorder %s193, %s194
      %p206 = scmp.eq.s32.totalorder %s32, 1
      %p207 = por %p205, %p206
      %p209 = scmp.ne.s32.totalorder %s194, %s208
      %p210 = scmp.eq.s32.totalorder %s32, 0
      %p211 = por %p209, %p210
      %s213 = sadd.s32 %s212, 1
      %p216 = scmp.eq.s32.totalorder %s26, 1
      %p217 = scmp.ne.s32.totalorder %s212, %s214
      %p218 = scmp.eq.s32.totalorder %s26, 0
      %p219 = por %p217, %p218
      %p220 = scmp.ne.s32.totalorder %s212, %s214
      %p221 = scmp.eq.s32.totalorder %s31, 1
      %p222 = por %p220, %p221
      %p223 = scmp.ne.s32.totalorder %s214, %s215
      %p224 = scmp.eq.s32.totalorder %s31, 0
      %p225 = por %p223, %p224
      %p226 = scmp.ne.s32.totalorder %s214, %s215
      %p227 = scmp.eq.s32.totalorder %s32, 1
      %p228 = por %p226, %p227
      %p230 = scmp.ne.s32.totalorder %s215, %s229
      %p231 = scmp.eq.s32.totalorder %s32, 0
      %p232 = por %p230, %p231
      %s234 = sadd.s32 %s233, 1
      %p237 = scmp.eq.s32.totalorder %s26, 1
      %p238 = scmp.ne.s32.totalorder %s233, %s235
      %p239 = scmp.eq.s32.totalorder %s26, 0
      %p240 = por %p238, %p239
      %p241 = scmp.ne.s32.totalorder %s233, %s235
      %p242 = scmp.eq.s32.totalorder %s31, 1
      %p243 = por %p241, %p242
      %p244 = scmp.ne.s32.totalorder %s235, %s236
      %p245 = scmp.eq.s32.totalorder %s31, 0
      %p246 = por %p244, %p245
      %p247 = scmp.ne.s32.totalorder %s235, %s236
      %p248 = scmp.eq.s32.totalorder %s32, 1
      %p249 = por %p247, %p248
      %p251 = scmp.ne.s32.totalorder %s236, %s250
      %p252 = scmp.eq.s32.totalorder %s32, 0
      %p253 = por %p251, %p252
      %s254 = ssub.s32 %s26, %s33
      %p255 = scmp.eq.s32.totalorder %s254, 0
      %s257 = sadd.s32 %s256, 1
      %s258 = scalar_select %p255, %s256, %s257
      %p261 = pneg %p255
      %p262 = scmp.eq.s32.totalorder %s26, 1
      %p263 = por %p261, %p262
      %p264 = scmp.ne.s32.totalorder %s256, %s259
      %p265 = scmp.eq.s32.totalorder %s26, 0
      %p266 = por %p264, %p265
      %p267 = scmp.ne.s32.totalorder %s256, %s259
      %p268 = scmp.eq.s32.totalorder %s31, 1
      %p269 = por %p267, %p268
      %p270 = scmp.ne.s32.totalorder %s259, %s260
      %p271 = scmp.eq.s32.totalorder %s31, 0
      %p272 = por %p270, %p271
      %p273 = scmp.ne.s32.totalorder %s259, %s260
      %p274 = scmp.eq.s32.totalorder %s32, 1
      %p275 = por %p273, %p274
      %p277 = scmp.ne.s32.totalorder %s260, %s276
      %p278 = scmp.eq.s32.totalorder %s32, 0
      %p279 = por %p277, %p278
      %p280 = scmp.le.s32.totalorder 1, %s26
      %p281 = scmp.lt.s32.totalorder %s26, 3
      %p282 = pnand %p280, %p281
      %p283 = pneg %p282
      // Predicated region
      $region9: #{tpu_custom_call.1} parent=5 // pred_check
        _
      $region10: #{tpu_custom_call.1} parent=5 // pred_check_branch
        %285 = sbr.rel (%p282) target = $region12
      $region11: #{tpu_custom_call.1} parent=5 // pred_region
        %s286 = ssub.s32 %s26, 1
        // Predicated region
        $region13: #{tpu_custom_call.1} parent=11 // pred_check
          %p287 = pneg %p99
        $region14: #{tpu_custom_call.1} parent=11 // pred_check_branch
          %289 = sbr.rel (%p287) target = $region16
        $region15: #{tpu_custom_call.1} parent=11 // pred_region
          %s291 = ssub.s32 1024, 1024
          %292 = vsyncadd [#allocation8], %s291
          %s293 = sshll.u32 [#allocation9], 4
          %s294 = int_to_ptr.vmem [resolvable:$true] %s293
          %299 = dma.hbm_to_vmem [thread:$0]  %s2, 1024, %s294, [#allocation8], 128, 128, 8
        $region16: #{tpu_custom_call.1} parent=11 // pred_fallthru
          _
        // Predicated region
        $region17: #{tpu_custom_call.1} parent=11 // pred_check
          %p300 = pneg %p120
        $region18: #{tpu_custom_call.1} parent=11 // pred_check_branch
          %302 = sbr.rel (%p300) target = $region20
        $region19: #{tpu_custom_call.1} parent=11 // pred_region
          _
        $region20: #{tpu_custom_call.1} parent=11 // pred_fallthru
          _
        // Predicated region
        $region21: #{tpu_custom_call.1} parent=11 // pred_check
          %p303 = pneg %p141
        $region22: #{tpu_custom_call.1} parent=11 // pred_check_branch
          %305 = sbr.rel (%p303) target = $region24
        $region23: #{tpu_custom_call.1} parent=11 // pred_region
          %s307 = ssub.s32 12288, 12288
          %308 = vsyncadd [#allocation11], %s307
          %s309 = sshll.u32 [#allocation10], 4
          %s310 = int_to_ptr.vmem [resolvable:$true] %s309
          %315 = dma.hbm_to_vmem [thread:$0]  %s4, 12288, %s310, [#allocation11], 128, 128, 8
        $region24: #{tpu_custom_call.1} parent=11 // pred_fallthru
          _
        // Predicated region
        $region25: #{tpu_custom_call.1} parent=11 // pred_check
          %p316 = pneg %p162
        $region26: #{tpu_custom_call.1} parent=11 // pred_check_branch
          %318 = sbr.rel (%p316) target = $region28
        $region27: #{tpu_custom_call.1} parent=11 // pred_region
          _
        $region28: #{tpu_custom_call.1} parent=11 // pred_fallthru
          _
        // Predicated region
        $region29: #{tpu_custom_call.1} parent=11 // pred_check
          %p319 = pneg %p183
        $region30: #{tpu_custom_call.1} parent=11 // pred_check_branch
          %321 = sbr.rel (%p319) target = $region32
        $region31: #{tpu_custom_call.1} parent=11 // pred_region
          _
        $region32: #{tpu_custom_call.1} parent=11 // pred_fallthru
          _
        // Predicated region
        $region33: #{tpu_custom_call.1} parent=11 // pred_check
          %p322 = pneg %p204
        $region34: #{tpu_custom_call.1} parent=11 // pred_check_branch
          %324 = sbr.rel (%p322) target = $region36
        $region35: #{tpu_custom_call.1} parent=11 // pred_region
          %s326 = ssub.s32 6144, 6144
          %327 = vsyncadd [#allocation11], %s326
          %s328 = sshll.u32 [#allocation12], 4
          %s329 = int_to_ptr.vmem [resolvable:$true] %s328
          %334 = dma.hbm_to_vmem [thread:$0]  %s7, 6144, %s329, [#allocation11], 128, 128, 8
        $region36: #{tpu_custom_call.1} parent=11 // pred_fallthru
          _
        // Predicated region
        $region37: #{tpu_custom_call.1} parent=11 // pred_check
          %p335 = pneg %p225
        $region38: #{tpu_custom_call.1} parent=11 // pred_check_branch
          %337 = sbr.rel (%p335) target = $region40
        $region39: #{tpu_custom_call.1} parent=11 // pred_region
          _
        $region40: #{tpu_custom_call.1} parent=11 // pred_fallthru
          _
        // Predicated region
        $region41: #{tpu_custom_call.1} parent=11 // pred_check
          %p338 = pneg %p246
        $region42: #{tpu_custom_call.1} parent=11 // pred_check_branch
          %340 = sbr.rel (%p338) target = $region44
        $region43: #{tpu_custom_call.1} parent=11 // pred_region
          _
        $region44: #{tpu_custom_call.1} parent=11 // pred_fallthru
          _
      $region12: #{tpu_custom_call.1} parent=5 // pred_fallthru
        _
      %p341 = scmp.lt.s32.totalorder %s26, 2
      // Predicated region
      $region45: #{tpu_custom_call.1} parent=5 // pred_check
        %p342 = pneg %p341
      $region46: #{tpu_custom_call.1} parent=5 // pred_check_branch
        %344 = sbr.rel (%p342) target = $region48
      $region47: #{tpu_custom_call.1} parent=5 // pred_region
        // Predicated region
        $region49: #{tpu_custom_call.1} parent=47 // pred_check
          %p345 = pneg %p46
        $region50: #{tpu_custom_call.1} parent=47 // pred_check_branch
          %347 = sbr.rel (%p345) target = $region52
        $region51: #{tpu_custom_call.1} parent=47 // pred_region
          %s348 = sand.u32 %s36, 1
          %s349 = scalar_lea.sflag [#allocation5], %s348
          %s350 = sand.u32 %s36, 1
          %s351 = smul.addr %s350, 8
          %s352 = scalar_lea.vmem [#allocation4], %s351
          %s354 = ssub.s32 128, 128
          %355 = vsyncadd %s349, %s354
          %s356 = smul.addr %s26, 128
          %s357 = scalar_lea.hbm %s0, %s356
          %s359 = sshll.u32 %s352, 4
          %s360 = int_to_ptr.vmem [resolvable:$true] %s359
          %362 = dma.hbm_to_vmem [thread:$0]  %s357, 128, %s360, %s349
        $region52: #{tpu_custom_call.1} parent=47 // pred_fallthru
          _
        // Predicated region
        $region53: #{tpu_custom_call.1} parent=47 // pred_check
          %p363 = pneg %p72
        $region54: #{tpu_custom_call.1} parent=47 // pred_check_branch
          %365 = sbr.rel (%p363) target = $region56
        $region55: #{tpu_custom_call.1} parent=47 // pred_region
          %s366 = sand.u32 %s26, 1
          %s367 = scalar_lea.sflag [#allocation8], %s366
          %s368 = sand.u32 %s62, 1
          %s369 = smul.addr %s368, 8
          %s370 = scalar_lea.vmem [#allocation7], %s369
          %s372 = ssub.s32 128, 128
          %373 = vsyncadd %s367, %s372
          %s374 = smul.addr %s26, 128
          %s375 = scalar_lea.hbm %s1, %s374
          %s377 = sshll.u32 %s370, 4
          %s378 = int_to_ptr.vmem [resolvable:$true] %s377
          %380 = dma.hbm_to_vmem [thread:$0]  %s375, 128, %s378, %s367
        $region56: #{tpu_custom_call.1} parent=47 // pred_fallthru
          _
      $region48: #{tpu_custom_call.1} parent=5 // pred_fallthru
        _
      %p381 = scmp.le.s32.totalorder 1, %s26
      %p382 = scmp.lt.s32.totalorder %s26, 3
      %p383 = pnand %p381, %p382
      %p384 = pneg %p383
      // Predicated region
      $region57: #{tpu_custom_call.1} parent=5 // pred_check
        _
      $region58: #{tpu_custom_call.1} parent=5 // pred_check_branch
        %386 = sbr.rel (%p383) target = $region60
      $region59: #{tpu_custom_call.1} parent=5 // pred_region
        %s387 = ssub.s32 %s26, 1
        %s388 = sand.u32 %s39, 1
        %s389 = scalar_lea.sflag [#allocation5], %s388
        %s390 = sand.u32 %s39, 1
        %s391 = smul.addr %s390, 8
        %s392 = scalar_lea.vmem [#allocation4], %s391
        // Predicated region
        $region61: #{tpu_custom_call.1} parent=59 // pred_check
          %p393 = pneg %p52
        $region62: #{tpu_custom_call.1} parent=59 // pred_check_branch
          %395 = sbr.rel (%p393) target = $region64
        $region63: #{tpu_custom_call.1} parent=59 // pred_region
          %396 = dma.done %s389, 128
        $region64: #{tpu_custom_call.1} parent=59 // pred_fallthru
          _
        %s397 = sand.u32 %s31, 1
        %s398 = scalar_lea.sflag [#allocation8], %s397
        %s399 = sand.u32 %s65, 1
        %s400 = smul.addr %s399, 8
        %s401 = scalar_lea.vmem [#allocation7], %s400
        // Predicated region
        $region65: #{tpu_custom_call.1} parent=59 // pred_check
          %p402 = pneg %p78
        $region66: #{tpu_custom_call.1} parent=59 // pred_check_branch
          %404 = sbr.rel (%p402) target = $region68
        $region67: #{tpu_custom_call.1} parent=59 // pred_region
          %405 = dma.done %s398, 128
        $region68: #{tpu_custom_call.1} parent=59 // pred_fallthru
          _
        // Predicated region
        $region69: #{tpu_custom_call.1} parent=59 // pred_check
          %p406 = pneg %p99
        $region70: #{tpu_custom_call.1} parent=59 // pred_check_branch
          %408 = sbr.rel (%p406) target = $region72
        $region71: #{tpu_custom_call.1} parent=59 // pred_region
          %409 = dma.done [#allocation8], 1024
        $region72: #{tpu_custom_call.1} parent=59 // pred_fallthru
          _
        // Predicated region
        $region73: #{tpu_custom_call.1} parent=59 // pred_check
          %p410 = pneg %p141
        $region74: #{tpu_custom_call.1} parent=59 // pred_check_branch
          %412 = sbr.rel (%p410) target = $region76
        $region75: #{tpu_custom_call.1} parent=59 // pred_region
          %413 = dma.done [#allocation11], 12288
        $region76: #{tpu_custom_call.1} parent=59 // pred_fallthru
          _
        // Predicated region
        $region77: #{tpu_custom_call.1} parent=59 // pred_check
          %p414 = pneg %p204
        $region78: #{tpu_custom_call.1} parent=59 // pred_check_branch
          %416 = sbr.rel (%p414) target = $region80
        $region79: #{tpu_custom_call.1} parent=59 // pred_region
          %417 = dma.done [#allocation11], 6144
        $region80: #{tpu_custom_call.1} parent=59 // pred_fallthru
          _
        %s418 = sand.u32 %s39, 1
        %s419 = scalar_lea.sflag [#allocation5], %s418
        %s420 = sand.u32 %s39, 1
        %s421 = smul.addr %s420, 8
        %s422 = scalar_lea.vmem [#allocation4], %s421
        %p423 = pneg %p52
        %p424 = pneg %p49
        %s425 = sand.u32 %s31, 1
        %s426 = scalar_lea.sflag [#allocation8], %s425
        %s427 = sand.u32 %s65, 1
        %s428 = smul.addr %s427, 8
        %s429 = scalar_lea.vmem [#allocation7], %s428
        %p430 = pneg %p78
        %p431 = pneg %p75
        %p432 = pneg %p99
        %p433 = pneg %p96
        %p434 = pneg %p120
        %p435 = pneg %p117
        %p436 = pneg %p141
        %p437 = pneg %p138
        %p438 = pneg %p162
        %p439 = pneg %p159
        %p440 = pneg %p183
        %p441 = pneg %p180
        %p442 = pneg %p204
        %p443 = pneg %p201
        %p444 = pneg %p225
        %p445 = pneg %p222
        %p446 = pneg %p246
        %p447 = pneg %p243
        %p448 = pneg %p272
        %p449 = pneg %p269
        %s450 = sand.u32 %s259, 1
        %s451 = scalar_lea.sflag [#allocation6], %s450
        %s452 = sand.u32 %s259, 1
        %s453 = smul.addr %s452, 8
        %s454 = scalar_lea.vmem [#allocation13], %s453
        %v455 = vld [vmem:[%s392] sm:$0xff]
        %v456 = vld [vmem:[#allocation9] sm:$0xff]
        %v457 = vld [vmem:[#allocation9 + $0x8] sm:$0xff]
        %v458 = vld [vmem:[#allocation9 + $0x10] sm:$0xff]
        %v459 = vld [vmem:[#allocation9 + $0x18] sm:$0xff]
        %v460 = vld [vmem:[#allocation9 + $0x20] sm:$0xff]
        %v461 = vld [vmem:[#allocation9 + $0x28] sm:$0xff]
        %v462 = vld [vmem:[#allocation9 + $0x30] sm:$0xff]
        %v463 = vld [vmem:[#allocation9 + $0x38] sm:$0xff]
        %v464 = vld [vmem:[%s3] sm:$0x1]
        %v466 = vlaneseq
        %v467 = vshrl.u32 %v466, 7
        %v468 = vsub.s32 0, %v467
        %v469 = vrot.slane %v464, %v468
        %vm471 = vcmask 523264
        %v473 = vsel %vm471, %v455, 0
        %475 = vmatprep.subr.mxu0 0.0
        %476 = vmatpush1.msra.mxu0 %v456
        %477 = vmatprep.subr.mxu0 0.0
        %478 = vmatpush1.msra.mxu0 %v457
        %479 = vmatprep.subr.mxu0 0.0
        %480 = vmatpush1.msra.mxu0 %v458
        %481 = vmatprep.subr.mxu0 0.0
        %482 = vmatpush1.msra.mxu0 %v459
        %483 = vmatprep.subr.mxu0 0.0
        %484 = vmatpush1.msra.mxu0 %v460
        %485 = vmatprep.subr.mxu0 0.0
        %486 = vmatpush1.msra.mxu0 %v461
        %487 = vmatprep.subr.mxu0 0.0
        %488 = vmatpush1.msra.mxu0 %v462
        %489 = vmatprep.subr.mxu0 0.0
        %490 = vmatpush1.msra.mxu0 %v463
        %491 = vmatprep.subr.mxu0 0.0
        %492 = vmatpush1.msra.mxu0 0.0
        %493 = vmatprep.subr.mxu0 0.0
        %494 = vmatpush1.msra.mxu0 0.0
        %495 = vmatprep.subr.mxu0 0.0
        %496 = vmatpush1.msra.mxu0 0.0
        %497 = vmatprep.subr.mxu0 0.0
        %498 = vmatpush1.msra.mxu0 0.0
        %499 = vmatprep.subr.mxu0 0.0
        %500 = vmatpush1.msra.mxu0 0.0
        %501 = vmatprep.subr.mxu0 0.0
        %502 = vmatpush1.msra.mxu0 0.0
        %503 = vmatprep.subr.mxu0 0.0
        %504 = vmatpush1.msra.mxu0 0.0
        %505 = vmatprep.subr.mxu0 0.0
        %506 = vmatpush1.msra.mxu0 0.0
        %507 = vmatprep.subr.mxu0 0.0
        %508 = vmatpush1.msra.mxu0 0.0
        %509 = vmatprep.subr.mxu0 0.0
        %510 = vmatpush1.msra.mxu0 0.0
        %511 = vmatprep.subr.mxu0 0.0
        %512 = vmatpush1.msra.mxu0 0.0
        %513 = vmatprep.subr.mxu0 0.0
        %514 = vmatpush1.msra.mxu0 0.0
        %515 = vmatprep.subr.mxu0 0.0
        %516 = vmatpush1.msra.mxu0 0.0
        %517 = vmatprep.subr.mxu0 0.0
        %518 = vmatpush1.msra.mxu0 0.0
        %519 = vmatprep.subr.mxu0 0.0
        %520 = vmatpush1.msra.mxu0 0.0
        %521 = vmatprep.subr.mxu0 0.0
        %522 = vmatpush1.msra.mxu0 0.0
        %523 = vmatprep.subr.mxu0 0.0
        %524 = vmatpush1.msra.mxu0 0.0
        %525 = vmatprep.subr.mxu0 0.0
        %526 = vmatpush1.msra.mxu0 0.0
        %527 = vmatprep.subr.mxu0 0.0
        %528 = vmatpush1.msra.mxu0 0.0
        %529 = vmatprep.subr.mxu0 0.0
        %530 = vmatpush1.msra.mxu0 0.0
        %531 = vmatprep.subr.mxu0 0.0
        %532 = vmatpush1.msra.mxu0 0.0
        %533 = vmatprep.subr.mxu0 0.0
        %534 = vmatpush1.msra.mxu0 0.0
        %535 = vmatprep.subr.mxu0 0.0
        %536 = vmatpush1.msra.mxu0 0.0
        %537 = vmatprep.subr.mxu0 0.0
        %538 = vmatpush1.msra.mxu0 0.0
        %539 = vmatprep.mubr.f32.mxu0 0.0
        %540 = vmatmul.mubr.f32.gmra.mrb[0].mxu0 %v473
        %v541 = vpop.f32.mrb[0].mxu0
        %v542 = vadd.f32 %v469, %v541
        %v543 = vpop.f32.mrb[0].mxu0
        %544 = vdwg.mxu0
        %v545 = vlaneseq
        %vm546 = vcmp.ge.s32.totalorder %v545, 0
        %vm547 = vcmp.lt.s32.totalorder %v545, 256
        %vm548 = vmand %vm546, %vm547
        %549 = vst.msk [vmem:[#allocation2] ss:$8 sm:$0x3] %vm548, 0.0
        %550 = vst.msk [vmem:[#allocation2] ss:$8 sm:$0x0] %vm548, 0.0
        %s551 = scalar_lea.vmem [#allocation2], 17
        %552 = vst.msk [vmem:[%s551] ss:$8 sm:$0x3] %vm548, 0.0
        %553 = vst.msk [vmem:[%s551] ss:$8 sm:$0x0] %vm548, 0.0
        %v555 = vrot.slane %v542, 7
        %557 = vst [vmem:[#allocation2] sm:$0xfe] %v555
        %558 = vst [vmem:[#allocation2 + $0x10] sm:$0x1] %v555
        %v559 = vld [vmem:[%s401] sm:$0xff]
        %v561 = vrot.slane %v559, 7
        %563 = vst [vmem:[#allocation2 + $0x8] sm:$0xfe] %v561
        %564 = vst [vmem:[#allocation2 + $0x18] sm:$0x1] %v561
        %v565 = vld [vmem:[#allocation2] sm:$0xff]
        %v566 = vld [vmem:[#allocation2 + $0x8] sm:$0xff]
        %v567 = vld [vmem:[#allocation10] sm:$0xff]
        %v568 = vld [vmem:[#allocation10 + $0x8] sm:$0xff]
        %v569 = vld [vmem:[#allocation10 + $0x10] sm:$0xff]
        %v570 = vld [vmem:[#allocation10 + $0x18] sm:$0xff]
        %v571 = vld [vmem:[#allocation10 + $0x20] sm:$0xff]
        %v572 = vld [vmem:[#allocation10 + $0x28] sm:$0xff]
        %v573 = vld [vmem:[#allocation10 + $0x30] sm:$0xff]
        %v574 = vld [vmem:[#allocation10 + $0x38] sm:$0xff]
        %v575 = vld [vmem:[#allocation10 + $0x40] sm:$0xff]
        %v576 = vld [vmem:[#allocation10 + $0x48] sm:$0xff]
        %v577 = vld [vmem:[#allocation10 + $0x50] sm:$0xff]
        %v578 = vld [vmem:[#allocation10 + $0x58] sm:$0xff]
        %v579 = vld [vmem:[#allocation10 + $0x60] sm:$0xff]
        %v580 = vld [vmem:[#allocation10 + $0x68] sm:$0xff]
        %v581 = vld [vmem:[#allocation10 + $0x70] sm:$0xff]
        %v582 = vld [vmem:[#allocation10 + $0x78] sm:$0xff]
        %v583 = vld [vmem:[#allocation10 + $0x80] sm:$0xff]
        %v584 = vld [vmem:[#allocation10 + $0x88] sm:$0xff]
        %v585 = vld [vmem:[#allocation10 + $0x90] sm:$0xff]
        %v586 = vld [vmem:[#allocation10 + $0x98] sm:$0xff]
        %v587 = vld [vmem:[#allocation10 + $0xa0] sm:$0xff]
        %v588 = vld [vmem:[#allocation10 + $0xa8] sm:$0xff]
        %v589 = vld [vmem:[#allocation10 + $0xb0] sm:$0xff]
        %v590 = vld [vmem:[#allocation10 + $0xb8] sm:$0xff]
        %v591 = vld [vmem:[#allocation10 + $0xc0] sm:$0xff]
        %v592 = vld [vmem:[#allocation10 + $0xc8] sm:$0xff]
        %v593 = vld [vmem:[#allocation10 + $0xd0] sm:$0xff]
        %v594 = vld [vmem:[#allocation10 + $0xd8] sm:$0xff]
        %v595 = vld [vmem:[#allocation10 + $0xe0] sm:$0xff]
        %v596 = vld [vmem:[#allocation10 + $0xe8] sm:$0xff]
        %v597 = vld [vmem:[#allocation10 + $0xf0] sm:$0xff]
        %v598 = vld [vmem:[#allocation10 + $0xf8] sm:$0xff]
        %v599 = vld [vmem:[#allocation2] sm:$0xfe]
        %v600 = vld [vmem:[#allocation2 + $0x8] sm:$0xfe]
        %v601 = vld [vmem:[#allocation2 + $0x10] sm:$0x1]
        %v602 = vld [vmem:[#allocation2 + $0x18] sm:$0x1]
        %s603 = scalar_lea.vmem [#allocation10], 256
        %v604 = vld [vmem:[%s603] sm:$0xff]
        %v605 = vld [vmem:[%s603 + $0x8] sm:$0xff]
        %v606 = vld [vmem:[%s603 + $0x10] sm:$0xff]
        %v607 = vld [vmem:[%s603 + $0x18] sm:$0xff]
        %v608 = vld [vmem:[%s603 + $0x20] sm:$0xff]
        %v609 = vld [vmem:[%s603 + $0x28] sm:$0xff]
        %v610 = vld [vmem:[%s603 + $0x30] sm:$0xff]
        %v611 = vld [vmem:[%s603 + $0x38] sm:$0xff]
        %v612 = vld [vmem:[%s603 + $0x40] sm:$0xff]
        %v613 = vld [vmem:[%s603 + $0x48] sm:$0xff]
        %v614 = vld [vmem:[%s603 + $0x50] sm:$0xff]
        %v615 = vld [vmem:[%s603 + $0x58] sm:$0xff]
        %v616 = vld [vmem:[%s603 + $0x60] sm:$0xff]
        %v617 = vld [vmem:[%s603 + $0x68] sm:$0xff]
        %v618 = vld [vmem:[%s603 + $0x70] sm:$0xff]
        %v619 = vld [vmem:[%s603 + $0x78] sm:$0xff]
        %v620 = vld [vmem:[%s603 + $0x80] sm:$0xff]
        %v621 = vld [vmem:[%s603 + $0x88] sm:$0xff]
        %v622 = vld [vmem:[%s603 + $0x90] sm:$0xff]
        %v623 = vld [vmem:[%s603 + $0x98] sm:$0xff]
        %v624 = vld [vmem:[%s603 + $0xa0] sm:$0xff]
        %v625 = vld [vmem:[%s603 + $0xa8] sm:$0xff]
        %v626 = vld [vmem:[%s603 + $0xb0] sm:$0xff]
        %v627 = vld [vmem:[%s603 + $0xb8] sm:$0xff]
        %v628 = vld [vmem:[%s603 + $0xc0] sm:$0xff]
        %v629 = vld [vmem:[%s603 + $0xc8] sm:$0xff]
        %v630 = vld [vmem:[%s603 + $0xd0] sm:$0xff]
        %v631 = vld [vmem:[%s603 + $0xd8] sm:$0xff]
        %v632 = vld [vmem:[%s603 + $0xe0] sm:$0xff]
        %v633 = vld [vmem:[%s603 + $0xe8] sm:$0xff]
        %v634 = vld [vmem:[%s603 + $0xf0] sm:$0xff]
        %v635 = vld [vmem:[%s603 + $0xf8] sm:$0xff]
        %vm640 = vcmask 1046528
        %v641 = vrot.slane %v599, 1
        %v642 = vrot.slane %v601, 1
        %v643 = vsel %vm640, %v641, %v642
        %v644 = vrot.slane %v600, 1
        %v645 = vrot.slane %v602, 1
        %v646 = vsel %vm640, %v644, %v645
        %649 = vmatprep.subr.mxu0 0.0
        %650 = vmatpush1.msra.mxu0 %v604
        %651 = vmatprep.subr.mxu0 0.0
        %652 = vmatpush1.msra.mxu0 %v605
        %653 = vmatprep.subr.mxu0 0.0
        %654 = vmatpush1.msra.mxu0 %v606
        %655 = vmatprep.subr.mxu0 0.0
        %656 = vmatpush1.msra.mxu0 %v607
        %657 = vmatprep.subr.mxu0 0.0
        %658 = vmatpush1.msra.mxu0 %v608
        %659 = vmatprep.subr.mxu0 0.0
        %660 = vmatpush1.msra.mxu0 %v609
        %661 = vmatprep.subr.mxu0 0.0
        %662 = vmatpush1.msra.mxu0 %v610
        %663 = vmatprep.subr.mxu0 0.0
        %664 = vmatpush1.msra.mxu0 %v611
        %665 = vmatprep.subr.mxu0 0.0
        %666 = vmatpush1.msra.mxu0 %v612
        %667 = vmatprep.subr.mxu0 0.0
        %668 = vmatpush1.msra.mxu0 %v613
        %669 = vmatprep.subr.mxu0 0.0
        %670 = vmatpush1.msra.mxu0 %v614
        %671 = vmatprep.subr.mxu0 0.0
        %672 = vmatpush1.msra.mxu0 %v615
        %673 = vmatprep.subr.mxu0 0.0
        %674 = vmatpush1.msra.mxu0 %v616
        %675 = vmatprep.subr.mxu0 0.0
        %676 = vmatpush1.msra.mxu0 %v617
        %677 = vmatprep.subr.mxu0 0.0
        %678 = vmatpush1.msra.mxu0 %v618
        %679 = vmatprep.subr.mxu0 0.0
        %680 = vmatpush1.msra.mxu0 %v619
        %681 = vmatprep.subr.mxu0 0.0
        %682 = vmatpush1.msra.mxu0 %v620
        %683 = vmatprep.subr.mxu0 0.0
        %684 = vmatpush1.msra.mxu0 %v621
        %685 = vmatprep.subr.mxu0 0.0
        %686 = vmatpush1.msra.mxu0 %v622
        %687 = vmatprep.subr.mxu0 0.0
        %688 = vmatpush1.msra.mxu0 %v623
        %689 = vmatprep.subr.mxu0 0.0
        %690 = vmatpush1.msra.mxu0 %v624
        %691 = vmatprep.subr.mxu0 0.0
        %692 = vmatpush1.msra.mxu0 %v625
        %693 = vmatprep.subr.mxu0 0.0
        %694 = vmatpush1.msra.mxu0 %v626
        %695 = vmatprep.subr.mxu0 0.0
        %696 = vmatpush1.msra.mxu0 %v627
        %697 = vmatprep.subr.mxu0 0.0
        %698 = vmatpush1.msra.mxu0 %v628
        %699 = vmatprep.subr.mxu0 0.0
        %700 = vmatpush1.msra.mxu0 %v629
        %701 = vmatprep.subr.mxu0 0.0
        %702 = vmatpush1.msra.mxu0 %v630
        %703 = vmatprep.subr.mxu0 0.0
        %704 = vmatpush1.msra.mxu0 %v631
        %705 = vmatprep.subr.mxu0 0.0
        %706 = vmatpush1.msra.mxu0 %v632
        %707 = vmatprep.subr.mxu0 0.0
        %708 = vmatpush1.msra.mxu0 %v633
        %709 = vmatprep.subr.mxu0 0.0
        %710 = vmatpush1.msra.mxu0 %v634
        %711 = vmatprep.subr.mxu0 0.0
        %712 = vmatpush1.msra.mxu0 %v635
        %713 = vmatprep.mubr.f32.mxu0 %v646
        %714 = vmatmul.mubr.f32.gmra.mrb[0].mxu0 %v643
        %v715 = vpop.f32.mrb[0].mxu0
        %v716 = vadd.f32 0.0, %v715
        %v717 = vpop.f32.mrb[0].mxu0
        %718 = vdwg.mxu0
        %719 = vmatprep.subr.mxu0 0.0
        %720 = vmatpush1.msra.mxu0 %v567
        %721 = vmatprep.subr.mxu0 0.0
        %722 = vmatpush1.msra.mxu0 %v568
        %723 = vmatprep.subr.mxu0 0.0
        %724 = vmatpush1.msra.mxu0 %v569
        %725 = vmatprep.subr.mxu0 0.0
        %726 = vmatpush1.msra.mxu0 %v570
        %727 = vmatprep.subr.mxu0 0.0
        %728 = vmatpush1.msra.mxu0 %v571
        %729 = vmatprep.subr.mxu0 0.0
        %730 = vmatpush1.msra.mxu0 %v572
        %731 = vmatprep.subr.mxu0 0.0
        %732 = vmatpush1.msra.mxu0 %v573
        %733 = vmatprep.subr.mxu0 0.0
        %734 = vmatpush1.msra.mxu0 %v574
        %735 = vmatprep.subr.mxu0 0.0
        %736 = vmatpush1.msra.mxu0 %v575
        %737 = vmatprep.subr.mxu0 0.0
        %738 = vmatpush1.msra.mxu0 %v576
        %739 = vmatprep.subr.mxu0 0.0
        %740 = vmatpush1.msra.mxu0 %v577
        %741 = vmatprep.subr.mxu0 0.0
        %742 = vmatpush1.msra.mxu0 %v578
        %743 = vmatprep.subr.mxu0 0.0
        %744 = vmatpush1.msra.mxu0 %v579
        %745 = vmatprep.subr.mxu0 0.0
        %746 = vmatpush1.msra.mxu0 %v580
        %747 = vmatprep.subr.mxu0 0.0
        %748 = vmatpush1.msra.mxu0 %v581
        %749 = vmatprep.subr.mxu0 0.0
        %750 = vmatpush1.msra.mxu0 %v582
        %751 = vmatprep.subr.mxu0 0.0
        %752 = vmatpush1.msra.mxu0 %v583
        %753 = vmatprep.subr.mxu0 0.0
        %754 = vmatpush1.msra.mxu0 %v584
        %755 = vmatprep.subr.mxu0 0.0
        %756 = vmatpush1.msra.mxu0 %v585
        %757 = vmatprep.subr.mxu0 0.0
        %758 = vmatpush1.msra.mxu0 %v586
        %759 = vmatprep.subr.mxu0 0.0
        %760 = vmatpush1.msra.mxu0 %v587
        %761 = vmatprep.subr.mxu0 0.0
        %762 = vmatpush1.msra.mxu0 %v588
        %763 = vmatprep.subr.mxu0 0.0
        %764 = vmatpush1.msra.mxu0 %v589
        %765 = vmatprep.subr.mxu0 0.0
        %766 = vmatpush1.msra.mxu0 %v590
        %767 = vmatprep.subr.mxu0 0.0
        %768 = vmatpush1.msra.mxu0 %v591
        %769 = vmatprep.subr.mxu0 0.0
        %770 = vmatpush1.msra.mxu0 %v592
        %771 = vmatprep.subr.mxu0 0.0
        %772 = vmatpush1.msra.mxu0 %v593
        %773 = vmatprep.subr.mxu0 0.0
        %774 = vmatpush1.msra.mxu0 %v594
        %775 = vmatprep.subr.mxu0 0.0
        %776 = vmatpush1.msra.mxu0 %v595
        %777 = vmatprep.subr.mxu0 0.0
        %778 = vmatpush1.msra.mxu0 %v596
        %779 = vmatprep.subr.mxu0 0.0
        %780 = vmatpush1.msra.mxu0 %v597
        %781 = vmatprep.subr.mxu0 0.0
        %782 = vmatpush1.msra.mxu0 %v598
        %783 = vmatprep.mubr.f32.mxu0 %v566
        %784 = vmatmul.mubr.f32.gmra.mrb[0].mxu0 %v565
        %v785 = vpop.f32.mrb[0].mxu0
        %v786 = vadd.f32 %v716, %v785
        %v787 = vpop.f32.mrb[0].mxu0
        %788 = vdwg.mxu0
        %v789 = vld [vmem:[#allocation2] sm:$0xfc]
        %v790 = vld [vmem:[#allocation2 + $0x8] sm:$0xfc]
        %v791 = vld [vmem:[#allocation2 + $0x10] sm:$0x3]
        %v792 = vld [vmem:[#allocation2 + $0x18] sm:$0x3]
        %s793 = scalar_lea.vmem [#allocation10], 512
        %v794 = vld [vmem:[%s793] sm:$0xff]
        %v795 = vld [vmem:[%s793 + $0x8] sm:$0xff]
        %v796 = vld [vmem:[%s793 + $0x10] sm:$0xff]
        %v797 = vld [vmem:[%s793 + $0x18] sm:$0xff]
        %v798 = vld [vmem:[%s793 + $0x20] sm:$0xff]
        %v799 = vld [vmem:[%s793 + $0x28] sm:$0xff]
        %v800 = vld [vmem:[%s793 + $0x30] sm:$0xff]
        %v801 = vld [vmem:[%s793 + $0x38] sm:$0xff]
        %v802 = vld [vmem:[%s793 + $0x40] sm:$0xff]
        %v803 = vld [vmem:[%s793 + $0x48] sm:$0xff]
        %v804 = vld [vmem:[%s793 + $0x50] sm:$0xff]
        %v805 = vld [vmem:[%s793 + $0x58] sm:$0xff]
        %v806 = vld [vmem:[%s793 + $0x60] sm:$0xff]
        %v807 = vld [vmem:[%s793 + $0x68] sm:$0xff]
        %v808 = vld [vmem:[%s793 + $0x70] sm:$0xff]
        %v809 = vld [vmem:[%s793 + $0x78] sm:$0xff]
        %v810 = vld [vmem:[%s793 + $0x80] sm:$0xff]
        %v811 = vld [vmem:[%s793 + $0x88] sm:$0xff]
        %v812 = vld [vmem:[%s793 + $0x90] sm:$0xff]
        %v813 = vld [vmem:[%s793 + $0x98] sm:$0xff]
        %v814 = vld [vmem:[%s793 + $0xa0] sm:$0xff]
        %v815 = vld [vmem:[%s793 + $0xa8] sm:$0xff]
        %v816 = vld [vmem:[%s793 + $0xb0] sm:$0xff]
        %v817 = vld [vmem:[%s793 + $0xb8] sm:$0xff]
        %v818 = vld [vmem:[%s793 + $0xc0] sm:$0xff]
        %v819 = vld [vmem:[%s793 + $0xc8] sm:$0xff]
        %v820 = vld [vmem:[%s793 + $0xd0] sm:$0xff]
        %v821 = vld [vmem:[%s793 + $0xd8] sm:$0xff]
        %v822 = vld [vmem:[%s793 + $0xe0] sm:$0xff]
        %v823 = vld [vmem:[%s793 + $0xe8] sm:$0xff]
        %v824 = vld [vmem:[%s793 + $0xf0] sm:$0xff]
        %v825 = vld [vmem:[%s793 + $0xf8] sm:$0xff]
        %vm830 = vcmask 1045504
        %v831 = vrot.slane %v789, 2
        %v832 = vrot.slane %v791, 2
        %v833 = vsel %vm830, %v831, %v832
        %v834 = vrot.slane %v790, 2
        %v835 = vrot.slane %v792, 2
        %v836 = vsel %vm830, %v834, %v835
        %839 = vmatprep.subr.mxu0 0.0
        %840 = vmatpush1.msra.mxu0 %v794
        %841 = vmatprep.subr.mxu0 0.0
        %842 = vmatpush1.msra.mxu0 %v795
        %843 = vmatprep.subr.mxu0 0.0
        %844 = vmatpush1.msra.mxu0 %v796
        %845 = vmatprep.subr.mxu0 0.0
        %846 = vmatpush1.msra.mxu0 %v797
        %847 = vmatprep.subr.mxu0 0.0
        %848 = vmatpush1.msra.mxu0 %v798
        %849 = vmatprep.subr.mxu0 0.0
        %850 = vmatpush1.msra.mxu0 %v799
        %851 = vmatprep.subr.mxu0 0.0
        %852 = vmatpush1.msra.mxu0 %v800
        %853 = vmatprep.subr.mxu0 0.0
        %854 = vmatpush1.msra.mxu0 %v801
        %855 = vmatprep.subr.mxu0 0.0
        %856 = vmatpush1.msra.mxu0 %v802
        %857 = vmatprep.subr.mxu0 0.0
        %858 = vmatpush1.msra.mxu0 %v803
        %859 = vmatprep.subr.mxu0 0.0
        %860 = vmatpush1.msra.mxu0 %v804
        %861 = vmatprep.subr.mxu0 0.0
        %862 = vmatpush1.msra.mxu0 %v805
        %863 = vmatprep.subr.mxu0 0.0
        %864 = vmatpush1.msra.mxu0 %v806
        %865 = vmatprep.subr.mxu0 0.0
        %866 = vmatpush1.msra.mxu0 %v807
        %867 = vmatprep.subr.mxu0 0.0
        %868 = vmatpush1.msra.mxu0 %v808
        %869 = vmatprep.subr.mxu0 0.0
        %870 = vmatpush1.msra.mxu0 %v809
        %871 = vmatprep.subr.mxu0 0.0
        %872 = vmatpush1.msra.mxu0 %v810
        %873 = vmatprep.subr.mxu0 0.0
        %874 = vmatpush1.msra.mxu0 %v811
        %875 = vmatprep.subr.mxu0 0.0
        %876 = vmatpush1.msra.mxu0 %v812
        %877 = vmatprep.subr.mxu0 0.0
        %878 = vmatpush1.msra.mxu0 %v813
        %879 = vmatprep.subr.mxu0 0.0
        %880 = vmatpush1.msra.mxu0 %v814
        %881 = vmatprep.subr.mxu0 0.0
        %882 = vmatpush1.msra.mxu0 %v815
        %883 = vmatprep.subr.mxu0 0.0
        %884 = vmatpush1.msra.mxu0 %v816
        %885 = vmatprep.subr.mxu0 0.0
        %886 = vmatpush1.msra.mxu0 %v817
        %887 = vmatprep.subr.mxu0 0.0
        %888 = vmatpush1.msra.mxu0 %v818
        %889 = vmatprep.subr.mxu0 0.0
        %890 = vmatpush1.msra.mxu0 %v819
        %891 = vmatprep.subr.mxu0 0.0
        %892 = vmatpush1.msra.mxu0 %v820
        %893 = vmatprep.subr.mxu0 0.0
        %894 = vmatpush1.msra.mxu0 %v821
        %895 = vmatprep.subr.mxu0 0.0
        %896 = vmatpush1.msra.mxu0 %v822
        %897 = vmatprep.subr.mxu0 0.0
        %898 = vmatpush1.msra.mxu0 %v823
        %899 = vmatprep.subr.mxu0 0.0
        %900 = vmatpush1.msra.mxu0 %v824
        %901 = vmatprep.subr.mxu0 0.0
        %902 = vmatpush1.msra.mxu0 %v825
        %903 = vmatprep.mubr.f32.mxu0 %v836
        %904 = vmatmul.mubr.f32.gmra.mrb[0].mxu0 %v833
        %v905 = vpop.f32.mrb[0].mxu0
        %v906 = vadd.f32 0.0, %v905
        %v907 = vpop.f32.mrb[0].mxu0
        %908 = vdwg.mxu0
        %v909 = vadd.f32 %v786, %v906
        %v910 = vld [vmem:[%s5] sm:$0x1]
        %v912 = vlaneseq
        %v913 = vshrl.u32 %v912, 7
        %v914 = vsub.s32 0, %v913
        %v915 = vrot.slane %v910, %v914
        %v917 = vmul.f32 %v909, %v915
        %v918 = vld [vmem:[%s6] sm:$0x1]
        %v920 = vlaneseq
        %v921 = vshrl.u32 %v920, 7
        %v922 = vsub.s32 0, %v921
        %v923 = vrot.slane %v918, %v922
        %v925 = vadd.f32 %v917, %v923
        %v926 = vmax.f32 %v925, 0.0
        %927 = vst [vmem:[#allocation3] sm:$0x1] 0.0
        %928 = vst [vmem:[#allocation3 + $0x9] sm:$0x1] 0.0
        %929 = vst [vmem:[#allocation3 + $0x1] sm:$0xff] %v926
        %v930 = vld [vmem:[#allocation3] sm:$0xff]
        %v931 = vld [vmem:[#allocation12] sm:$0xff]
        %v932 = vld [vmem:[#allocation12 + $0x8] sm:$0xff]
        %v933 = vld [vmem:[#allocation12 + $0x10] sm:$0xff]
        %v934 = vld [vmem:[#allocation12 + $0x18] sm:$0xff]
        %v935 = vld [vmem:[#allocation12 + $0x20] sm:$0xff]
        %v936 = vld [vmem:[#allocation12 + $0x28] sm:$0xff]
        %v937 = vld [vmem:[#allocation12 + $0x30] sm:$0xff]
        %v938 = vld [vmem:[#allocation12 + $0x38] sm:$0xff]
        %v939 = vld [vmem:[#allocation12 + $0x40] sm:$0xff]
        %v940 = vld [vmem:[#allocation12 + $0x48] sm:$0xff]
        %v941 = vld [vmem:[#allocation12 + $0x50] sm:$0xff]
        %v942 = vld [vmem:[#allocation12 + $0x58] sm:$0xff]
        %v943 = vld [vmem:[#allocation12 + $0x60] sm:$0xff]
        %v944 = vld [vmem:[#allocation12 + $0x68] sm:$0xff]
        %v945 = vld [vmem:[#allocation12 + $0x70] sm:$0xff]
        %v946 = vld [vmem:[#allocation12 + $0x78] sm:$0xff]
        %v947 = vld [vmem:[#allocation3 + $0x1] sm:$0xff]
        %s948 = scalar_lea.vmem [#allocation12], 128
        %v949 = vld [vmem:[%s948] sm:$0xff]
        %v950 = vld [vmem:[%s948 + $0x8] sm:$0xff]
        %v951 = vld [vmem:[%s948 + $0x10] sm:$0xff]
        %v952 = vld [vmem:[%s948 + $0x18] sm:$0xff]
        %v953 = vld [vmem:[%s948 + $0x20] sm:$0xff]
        %v954 = vld [vmem:[%s948 + $0x28] sm:$0xff]
        %v955 = vld [vmem:[%s948 + $0x30] sm:$0xff]
        %v956 = vld [vmem:[%s948 + $0x38] sm:$0xff]
        %v957 = vld [vmem:[%s948 + $0x40] sm:$0xff]
        %v958 = vld [vmem:[%s948 + $0x48] sm:$0xff]
        %v959 = vld [vmem:[%s948 + $0x50] sm:$0xff]
        %v960 = vld [vmem:[%s948 + $0x58] sm:$0xff]
        %v961 = vld [vmem:[%s948 + $0x60] sm:$0xff]
        %v962 = vld [vmem:[%s948 + $0x68] sm:$0xff]
        %v963 = vld [vmem:[%s948 + $0x70] sm:$0xff]
        %v964 = vld [vmem:[%s948 + $0x78] sm:$0xff]
        %965 = vmatprep.subr.mxu0 0.0
        %966 = vmatpush1.msra.mxu0 %v949
        %967 = vmatprep.subr.mxu0 0.0
        %968 = vmatpush1.msra.mxu0 %v950
        %969 = vmatprep.subr.mxu0 0.0
        %970 = vmatpush1.msra.mxu0 %v951
        %971 = vmatprep.subr.mxu0 0.0
        %972 = vmatpush1.msra.mxu0 %v952
        %973 = vmatprep.subr.mxu0 0.0
        %974 = vmatpush1.msra.mxu0 %v953
        %975 = vmatprep.subr.mxu0 0.0
        %976 = vmatpush1.msra.mxu0 %v954
        %977 = vmatprep.subr.mxu0 0.0
        %978 = vmatpush1.msra.mxu0 %v955
        %979 = vmatprep.subr.mxu0 0.0
        %980 = vmatpush1.msra.mxu0 %v956
        %981 = vmatprep.subr.mxu0 0.0
        %982 = vmatpush1.msra.mxu0 %v957
        %983 = vmatprep.subr.mxu0 0.0
        %984 = vmatpush1.msra.mxu0 %v958
        %985 = vmatprep.subr.mxu0 0.0
        %986 = vmatpush1.msra.mxu0 %v959
        %987 = vmatprep.subr.mxu0 0.0
        %988 = vmatpush1.msra.mxu0 %v960
        %989 = vmatprep.subr.mxu0 0.0
        %990 = vmatpush1.msra.mxu0 %v961
        %991 = vmatprep.subr.mxu0 0.0
        %992 = vmatpush1.msra.mxu0 %v962
        %993 = vmatprep.subr.mxu0 0.0
        %994 = vmatpush1.msra.mxu0 %v963
        %995 = vmatprep.subr.mxu0 0.0
        %996 = vmatpush1.msra.mxu0 %v964
        %997 = vmatprep.subr.mxu0 0.0
        %998 = vmatpush1.msra.mxu0 0.0
        %999 = vmatprep.subr.mxu0 0.0
        %1000 = vmatpush1.msra.mxu0 0.0
        %1001 = vmatprep.subr.mxu0 0.0
        %1002 = vmatpush1.msra.mxu0 0.0
        %1003 = vmatprep.subr.mxu0 0.0
        %1004 = vmatpush1.msra.mxu0 0.0
        %1005 = vmatprep.subr.mxu0 0.0
        %1006 = vmatpush1.msra.mxu0 0.0
        %1007 = vmatprep.subr.mxu0 0.0
        %1008 = vmatpush1.msra.mxu0 0.0
        %1009 = vmatprep.subr.mxu0 0.0
        %1010 = vmatpush1.msra.mxu0 0.0
        %1011 = vmatprep.subr.mxu0 0.0
        %1012 = vmatpush1.msra.mxu0 0.0
        %1013 = vmatprep.subr.mxu0 0.0
        %1014 = vmatpush1.msra.mxu0 0.0
        %1015 = vmatprep.subr.mxu0 0.0
        %1016 = vmatpush1.msra.mxu0 0.0
        %1017 = vmatprep.subr.mxu0 0.0
        %1018 = vmatpush1.msra.mxu0 0.0
        %1019 = vmatprep.subr.mxu0 0.0
        %1020 = vmatpush1.msra.mxu0 0.0
        %1021 = vmatprep.subr.mxu0 0.0
        %1022 = vmatpush1.msra.mxu0 0.0
        %1023 = vmatprep.subr.mxu0 0.0
        %1024 = vmatpush1.msra.mxu0 0.0
        %1025 = vmatprep.subr.mxu0 0.0
        %1026 = vmatpush1.msra.mxu0 0.0
        %1027 = vmatprep.subr.mxu0 0.0
        %1028 = vmatpush1.msra.mxu0 0.0
        %1029 = vmatprep.mubr.f32.mxu0 0.0
        %1030 = vmatmul.mubr.f32.gmra.mrb[0].mxu0 %v947
        %v1031 = vpop.f32.mrb[0].mxu0
        %v1032 = vadd.f32 0.0, %v1031
        %v1033 = vpop.f32.mrb[0].mxu0
        %1034 = vdwg.mxu0
        %1035 = vmatprep.subr.mxu0 0.0
        %1036 = vmatpush1.msra.mxu0 %v931
        %1037 = vmatprep.subr.mxu0 0.0
        %1038 = vmatpush1.msra.mxu0 %v932
        %1039 = vmatprep.subr.mxu0 0.0
        %1040 = vmatpush1.msra.mxu0 %v933
        %1041 = vmatprep.subr.mxu0 0.0
        %1042 = vmatpush1.msra.mxu0 %v934
        %1043 = vmatprep.subr.mxu0 0.0
        %1044 = vmatpush1.msra.mxu0 %v935
        %1045 = vmatprep.subr.mxu0 0.0
        %1046 = vmatpush1.msra.mxu0 %v936
        %1047 = vmatprep.subr.mxu0 0.0
        %1048 = vmatpush1.msra.mxu0 %v937
        %1049 = vmatprep.subr.mxu0 0.0
        %1050 = vmatpush1.msra.mxu0 %v938
        %1051 = vmatprep.subr.mxu0 0.0
        %1052 = vmatpush1.msra.mxu0 %v939
        %1053 = vmatprep.subr.mxu0 0.0
        %1054 = vmatpush1.msra.mxu0 %v940
        %1055 = vmatprep.subr.mxu0 0.0
        %1056 = vmatpush1.msra.mxu0 %v941
        %1057 = vmatprep.subr.mxu0 0.0
        %1058 = vmatpush1.msra.mxu0 %v942
        %1059 = vmatprep.subr.mxu0 0.0
        %1060 = vmatpush1.msra.mxu0 %v943
        %1061 = vmatprep.subr.mxu0 0.0
        %1062 = vmatpush1.msra.mxu0 %v944
        %1063 = vmatprep.subr.mxu0 0.0
        %1064 = vmatpush1.msra.mxu0 %v945
        %1065 = vmatprep.subr.mxu0 0.0
        %1066 = vmatpush1.msra.mxu0 %v946
        %1067 = vmatprep.subr.mxu0 0.0
        %1068 = vmatpush1.msra.mxu0 0.0
        %1069 = vmatprep.subr.mxu0 0.0
        %1070 = vmatpush1.msra.mxu0 0.0
        %1071 = vmatprep.subr.mxu0 0.0
        %1072 = vmatpush1.msra.mxu0 0.0
        %1073 = vmatprep.subr.mxu0 0.0
        %1074 = vmatpush1.msra.mxu0 0.0
        %1075 = vmatprep.subr.mxu0 0.0
        %1076 = vmatpush1.msra.mxu0 0.0
        %1077 = vmatprep.subr.mxu0 0.0
        %1078 = vmatpush1.msra.mxu0 0.0
        %1079 = vmatprep.subr.mxu0 0.0
        %1080 = vmatpush1.msra.mxu0 0.0
        %1081 = vmatprep.subr.mxu0 0.0
        %1082 = vmatpush1.msra.mxu0 0.0
        %1083 = vmatprep.subr.mxu0 0.0
        %1084 = vmatpush1.msra.mxu0 0.0
        %1085 = vmatprep.subr.mxu0 0.0
        %1086 = vmatpush1.msra.mxu0 0.0
        %1087 = vmatprep.subr.mxu0 0.0
        %1088 = vmatpush1.msra.mxu0 0.0
        %1089 = vmatprep.subr.mxu0 0.0
        %1090 = vmatpush1.msra.mxu0 0.0
        %1091 = vmatprep.subr.mxu0 0.0
        %1092 = vmatpush1.msra.mxu0 0.0
        %1093 = vmatprep.subr.mxu0 0.0
        %1094 = vmatpush1.msra.mxu0 0.0
        %1095 = vmatprep.subr.mxu0 0.0
        %1096 = vmatpush1.msra.mxu0 0.0
        %1097 = vmatprep.subr.mxu0 0.0
        %1098 = vmatpush1.msra.mxu0 0.0
        %1099 = vmatprep.mubr.f32.mxu0 0.0
        %1100 = vmatmul.mubr.f32.gmra.mrb[0].mxu0 %v930
        %v1101 = vpop.f32.mrb[0].mxu0
        %v1102 = vadd.f32 %v1032, %v1101
        %v1103 = vpop.f32.mrb[0].mxu0
        %1104 = vdwg.mxu0
        %v1105 = vld [vmem:[#allocation3 + $0x2] sm:$0xff]
        %s1106 = scalar_lea.vmem [#allocation12], 256
        %v1107 = vld [vmem:[%s1106] sm:$0xff]
        %v1108 = vld [vmem:[%s1106 + $0x8] sm:$0xff]
        %v1109 = vld [vmem:[%s1106 + $0x10] sm:$0xff]
        %v1110 = vld [vmem:[%s1106 + $0x18] sm:$0xff]
        %v1111 = vld [vmem:[%s1106 + $0x20] sm:$0xff]
        %v1112 = vld [vmem:[%s1106 + $0x28] sm:$0xff]
        %v1113 = vld [vmem:[%s1106 + $0x30] sm:$0xff]
        %v1114 = vld [vmem:[%s1106 + $0x38] sm:$0xff]
        %v1115 = vld [vmem:[%s1106 + $0x40] sm:$0xff]
        %v1116 = vld [vmem:[%s1106 + $0x48] sm:$0xff]
        %v1117 = vld [vmem:[%s1106 + $0x50] sm:$0xff]
        %v1118 = vld [vmem:[%s1106 + $0x58] sm:$0xff]
        %v1119 = vld [vmem:[%s1106 + $0x60] sm:$0xff]
        %v1120 = vld [vmem:[%s1106 + $0x68] sm:$0xff]
        %v1121 = vld [vmem:[%s1106 + $0x70] sm:$0xff]
        %v1122 = vld [vmem:[%s1106 + $0x78] sm:$0xff]
        %1123 = vmatprep.subr.mxu0 0.0
        %1124 = vmatpush1.msra.mxu0 %v1107
        %1125 = vmatprep.subr.mxu0 0.0
        %1126 = vmatpush1.msra.mxu0 %v1108
        %1127 = vmatprep.subr.mxu0 0.0
        %1128 = vmatpush1.msra.mxu0 %v1109
        %1129 = vmatprep.subr.mxu0 0.0
        %1130 = vmatpush1.msra.mxu0 %v1110
        %1131 = vmatprep.subr.mxu0 0.0
        %1132 = vmatpush1.msra.mxu0 %v1111
        %1133 = vmatprep.subr.mxu0 0.0
        %1134 = vmatpush1.msra.mxu0 %v1112
        %1135 = vmatprep.subr.mxu0 0.0
        %1136 = vmatpush1.msra.mxu0 %v1113
        %1137 = vmatprep.subr.mxu0 0.0
        %1138 = vmatpush1.msra.mxu0 %v1114
        %1139 = vmatprep.subr.mxu0 0.0
        %1140 = vmatpush1.msra.mxu0 %v1115
        %1141 = vmatprep.subr.mxu0 0.0
        %1142 = vmatpush1.msra.mxu0 %v1116
        %1143 = vmatprep.subr.mxu0 0.0
        %1144 = vmatpush1.msra.mxu0 %v1117
        %1145 = vmatprep.subr.mxu0 0.0
        %1146 = vmatpush1.msra.mxu0 %v1118
        %1147 = vmatprep.subr.mxu0 0.0
        %1148 = vmatpush1.msra.mxu0 %v1119
        %1149 = vmatprep.subr.mxu0 0.0
        %1150 = vmatpush1.msra.mxu0 %v1120
        %1151 = vmatprep.subr.mxu0 0.0
        %1152 = vmatpush1.msra.mxu0 %v1121
        %1153 = vmatprep.subr.mxu0 0.0
        %1154 = vmatpush1.msra.mxu0 %v1122
        %1155 = vmatprep.subr.mxu0 0.0
        %1156 = vmatpush1.msra.mxu0 0.0
        %1157 = vmatprep.subr.mxu0 0.0
        %1158 = vmatpush1.msra.mxu0 0.0
        %1159 = vmatprep.subr.mxu0 0.0
        %1160 = vmatpush1.msra.mxu0 0.0
        %1161 = vmatprep.subr.mxu0 0.0
        %1162 = vmatpush1.msra.mxu0 0.0
        %1163 = vmatprep.subr.mxu0 0.0
        %1164 = vmatpush1.msra.mxu0 0.0
        %1165 = vmatprep.subr.mxu0 0.0
        %1166 = vmatpush1.msra.mxu0 0.0
        %1167 = vmatprep.subr.mxu0 0.0
        %1168 = vmatpush1.msra.mxu0 0.0
        %1169 = vmatprep.subr.mxu0 0.0
        %1170 = vmatpush1.msra.mxu0 0.0
        %1171 = vmatprep.subr.mxu0 0.0
        %1172 = vmatpush1.msra.mxu0 0.0
        %1173 = vmatprep.subr.mxu0 0.0
        %1174 = vmatpush1.msra.mxu0 0.0
        %1175 = vmatprep.subr.mxu0 0.0
        %1176 = vmatpush1.msra.mxu0 0.0
        %1177 = vmatprep.subr.mxu0 0.0
        %1178 = vmatpush1.msra.mxu0 0.0
        %1179 = vmatprep.subr.mxu0 0.0
        %1180 = vmatpush1.msra.mxu0 0.0
        %1181 = vmatprep.subr.mxu0 0.0
        %1182 = vmatpush1.msra.mxu0 0.0
        %1183 = vmatprep.subr.mxu0 0.0
        %1184 = vmatpush1.msra.mxu0 0.0
        %1185 = vmatprep.subr.mxu0 0.0
        %1186 = vmatpush1.msra.mxu0 0.0
        %1187 = vmatprep.mubr.f32.mxu0 0.0
        %1188 = vmatmul.mubr.f32.gmra.mrb[0].mxu0 %v1105
        %v1189 = vpop.f32.mrb[0].mxu0
        %v1190 = vadd.f32 0.0, %v1189
        %v1191 = vpop.f32.mrb[0].mxu0
        %1192 = vdwg.mxu0
        %v1193 = vadd.f32 %v1102, %v1190
        %v1194 = vld [vmem:[%s8] sm:$0x1]
        %v1196 = vlaneseq
        %v1197 = vshrl.u32 %v1196, 7
        %v1198 = vsub.s32 0, %v1197
        %v1199 = vrot.slane %v1194, %v1198
        %v1201 = vmul.f32 %v1193, %v1199
        %v1202 = vld [vmem:[%s9] sm:$0x1]
        %v1204 = vlaneseq
        %v1205 = vshrl.u32 %v1204, 7
        %v1206 = vsub.s32 0, %v1205
        %v1207 = vrot.slane %v1202, %v1206
        %v1209 = vadd.f32 %v1201, %v1207
        %v1210 = vmax.f32 %v1209, 0.0
        %1211 = vst [vmem:[%s454] sm:$0xff] %v1210
        %s1212 = sand.u32 %s259, 1
        %s1213 = scalar_lea.sflag [#allocation6], %s1212
        %s1214 = sand.u32 %s259, 1
        %s1215 = smul.addr %s1214, 8
        %s1216 = scalar_lea.vmem [#allocation13], %s1215
        // Predicated region
        $region81: #{tpu_custom_call.1} parent=59 // pred_check
          %p1217 = pneg %p269
        $region82: #{tpu_custom_call.1} parent=59 // pred_check_branch
          %1219 = sbr.rel (%p1217) target = $region84
        $region83: #{tpu_custom_call.1} parent=59 // pred_region
          %s1221 = ssub.s32 128, 128
          %1222 = vsyncadd %s1213, %s1221
          %s1223 = smul.addr %s31, 128
          %s1224 = scalar_lea.hbm %s10, %s1223
          %s1226 = sshll.u32 %s1216, 4
          %s1227 = int_to_ptr.vmem [resolvable:$true] %s1226
          %1229 = dma.vmem_to_hbm [thread:$0]  %s1227, 128, %s1224, %s1213
        $region84: #{tpu_custom_call.1} parent=59 // pred_fallthru
          _
      $region60: #{tpu_custom_call.1} parent=5 // pred_fallthru
        _
      %p1230 = scmp.le.s32.totalorder 2, %s26
      // Predicated region
      $region85: #{tpu_custom_call.1} parent=5 // pred_check
        %p1231 = pneg %p1230
      $region86: #{tpu_custom_call.1} parent=5 // pred_check_branch
        %1233 = sbr.rel (%p1231) target = $region88
      $region87: #{tpu_custom_call.1} parent=5 // pred_region
        %s1234 = ssub.s32 %s26, 2
        // Predicated region
        $region89: #{tpu_custom_call.1} parent=87 // pred_check
          %p1235 = pneg %p275
        $region90: #{tpu_custom_call.1} parent=87 // pred_check_branch
          %1237 = sbr.rel (%p1235) target = $region92
        $region91: #{tpu_custom_call.1} parent=87 // pred_region
          %s1238 = sand.u32 %s260, 1
          %s1239 = scalar_lea.sflag [#allocation6], %s1238
          %s1240 = sand.u32 %s260, 1
          %s1241 = smul.addr %s1240, 8
          %s1242 = scalar_lea.vmem [#allocation13], %s1241
          %1243 = dma.done %s1239, 128
        $region92: #{tpu_custom_call.1} parent=87 // pred_fallthru
          _
      $region88: #{tpu_custom_call.1} parent=5 // pred_fallthru
        _
    $region6: #{tpu_custom_call.1} parent=1 // loop_footer
      %s30 = sadd.s32 1, %s26
    $region7: #{tpu_custom_call.1} parent=1 // loop_footer_branch
      %25 = sbr.rel target = $region3
    $region8: #{tpu_custom_call.1} parent=1 // loop_exit
      _
    %1244 = vsyncpa [#allocation5], 1
    %s1245 = scalar_lea.sflag [#allocation5], 1
    %1246 = vsyncpa %s1245, 1
    %1247 = vsyncpa [#allocation8], 1
    %s1248 = scalar_lea.sflag [#allocation8], 1
    %1249 = vsyncpa %s1248, 1
    %1250 = vsyncpa [#allocation11], 1
    %1251 = vsyncpa [#allocation6], 1
    %s1252 = scalar_lea.sflag [#allocation6], 1
    %1253 = vsyncpa %s1252, 1

</llo_original>
